<compile_context>
chip_gen: v6e
topology: v6e:2x2x1
jax: 0.10.0
libtpu: 0.0.40
codegen_flags: <defaults>
</compile_context>

<pallas_src>
import jax
import jax.numpy as jnp
from jax.experimental import pallas as pl
from jax.experimental.pallas import tpu as pltpu


# ----------------------------------------------------------------------------- kernel
def price_rnn_kernel(x_ref,      # (T, B, I)      f32
                     wih0_ref,   # (I, Hp)        f32  (W_ih_l0^T, zero-padded cols)
                     whh0_ref,   # (Hp, Hp)       f32  (W_hh_l0^T, zero-padded)
                     b0_ref,     # (1, Hp)        f32  (b_ih_l0 + b_hh_l0, padded)
                     w1_ref,     # (2*Hp, Hp)     f32  ([W_ih_l1^T ; W_hh_l1^T], padded)
                     b1_ref,     # (1, Hp)        f32  (b_ih_l1 + b_hh_l1, padded)
                     wfc_ref,    # (1, Hp)        f32  (fc.weight row, padded)
                     bfc_ref,    # (1, 1)         f32  (fc.bias)
                     out_ref):   # (B, 1)         f32
    T, B, I = x_ref.shape
    Hp = whh0_ref.shape[0]

    wih0 = wih0_ref[...]
    whh0 = whh0_ref[...]
    b0 = b0_ref[...]
    w1 = w1_ref[...]
    b1 = b1_ref[...]

    # --- Layer-0 input projection, hoisted off the serial carry chain -------------
    # Each xw[t] depends only on x, not on h0/h1, so after unrolling the time loop
    # the scheduler can overlap these with the recurrent MXU work.
    if I == 1:
        # (B,1) * (1,Hp) broadcast-multiply on the VPU; avoids K=1 MXU passes.
        xw = [x_ref[t] * wih0 + b0 for t in range(T)]
    else:
        xw = [jnp.dot(x_ref[t], wih0, preferred_element_type=jnp.float32) + b0
              for t in range(T)]

    h0 = jnp.zeros((B, Hp), jnp.float32)
    h1 = jnp.zeros((B, Hp), jnp.float32)

    # --- Fully unrolled time recurrence (T is small and static) -------------------
    # Per step the serial path is: one (B,Hp)@(Hp,Hp) matmul + tanh for layer 0,
    # then one fused (B,2Hp)@(2Hp,Hp) matmul + tanh for layer 1.
    for t in range(T):
        h0 = jnp.tanh(xw[t]
                      + jnp.dot(h0, whh0, preferred_element_type=jnp.float32))
        cat = jnp.concatenate([h0, h1], axis=-1)            # (B, 2*Hp), lane-aligned
        h1 = jnp.tanh(jnp.dot(cat, w1, preferred_element_type=jnp.float32) + b1)

    # --- FC head on VPU + lane reduce (padded wfc columns are zero => exact) ------
    out_ref[...] = (jnp.sum(h1 * wfc_ref[...], axis=-1, keepdims=True)
                    + bfc_ref[...])


# ----------------------------------------------------------------------------- wrapper
def price_rnn_forward(x, params):
    """x: (B, T, I) float32; params: dict of PyTorch-convention weights."""
    B, T, I = x.shape
    H = params["W_hh_l0"].shape[0]
    Hp = max(128, ((H + 127) // 128) * 128)        # pad hidden dim to full lane width
    f32 = jnp.float32

    x_tbi = jnp.transpose(x, (1, 0, 2)).astype(f32)                      # (T, B, I)

    pad_h = Hp - H
    # Layer 0 (zero padding keeps padded hidden units exactly zero: tanh(0)=0).
    wih0_t = jnp.pad(params["W_ih_l0"].T.astype(f32), ((0, 0), (0, pad_h)))   # (I, Hp)
    whh0_t = jnp.pad(params["W_hh_l0"].T.astype(f32), ((0, pad_h), (0, pad_h)))
    b0 = jnp.pad((params["b_ih_l0"] + params["b_hh_l0"]).astype(f32),
                 (0, pad_h)).reshape(1, Hp)
    # Layer 1: fuse [input-weight ; hidden-weight] into one (2*Hp, Hp) matrix.
    wih1_t = jnp.pad(params["W_ih_l1"].T.astype(f32), ((0, pad_h), (0, pad_h)))
    whh1_t = jnp.pad(params["W_hh_l1"].T.astype(f32), ((0, pad_h), (0, pad_h)))
    w1 = jnp.concatenate([wih1_t, whh1_t], axis=0)                       # (2*Hp, Hp)
    b1 = jnp.pad((params["b_ih_l1"] + params["b_hh_l1"]).astype(f32),
                 (0, pad_h)).reshape(1, Hp)
    # FC head as a (1, Hp) row for VPU multiply + lane reduction.
    wfc = jnp.pad(params["W_fc"].astype(f32), ((0, 0), (0, pad_h)))      # (1, Hp)
    bfc = params["b_fc"].astype(f32).reshape(1, 1)

    vmem = pl.BlockSpec(memory_space=pltpu.MemorySpace.VMEM)

    # Advisory cost estimate (unpadded math): per step B*I*H (input proj),
    # B*H*H (layer-0 recurrent), B*2H*H (fused layer-1); plus the FC head.
    flops = 2 * T * (B * I * H + B * H * H + B * 2 * H * H) + 2 * B * H
    transcendentals = 2 * T * B * H
    bytes_accessed = 4 * (x_tbi.size + wih0_t.size + whh0_t.size + b0.size
                          + w1.size + b1.size + wfc.size + bfc.size + B)

    # NOTE: at toy sizes everything fits VMEM; if T/B/I scale up, tile T via a grid
    # axis (BlockSpec on the leading dim) instead of whole-sequence residency,
    # especially on v7x (64 MiB VMEM).
    out = pl.pallas_call(
        price_rnn_kernel,
        out_shape=jax.ShapeDtypeStruct((B, 1), f32),
        in_specs=[vmem] * 8,
        out_specs=vmem,
        cost_estimate=pl.CostEstimate(flops=flops,
                                      transcendentals=transcendentals,
                                      bytes_accessed=bytes_accessed),
    )(x_tbi, wih0_t, whh0_t, b0, w1, b1, wfc, bfc)
    return out


# ----------------------------------------------------------------------------- reference
def price_rnn_reference(x, params):
    """Pure-JAX reference of the PyTorch forward (for verification)."""
    B, T, I = x.shape
    H = params["W_hh_l0"].shape[0]
    h0 = jnp.zeros((B, H), jnp.float32)
    h1 = jnp.zeros((B, H), jnp.float32)
    for t in range(T):
        x_t = x[:, t, :]
        h0 = jnp.tanh(x_t @ params["W_ih_l0"].T + params["b_ih_l0"]
                      + h0 @ params["W_hh_l0"].T + params["b_hh_l0"])
        h1 = jnp.tanh(h0 @ params["W_ih_l1"].T + params["b_ih_l1"]
                      + h1 @ params["W_hh_l1"].T + params["b_hh_l1"])
    return h1 @ params["W_fc"].T + params["b_fc"]


# ----------------------------------------------------------------------------- params
def init_params(key, input_size, hidden_size):
    """Deterministic init mirroring PyTorch nn.RNN / nn.Linear uniform(-k, k)."""
    ks = jax.random.split(key, 10)
    k_rnn = 1.0 / jnp.sqrt(hidden_size)
    k_fc = 1.0 / jnp.sqrt(hidden_size)
    u = lambda k, shape, lim: jax.random.uniform(k, shape, jnp.float32, -lim, lim)
    return {
        "W_ih_l0": u(ks[0], (hidden_size, input_size), k_rnn),
        "W_hh_l0": u(ks[1], (hidden_size, hidden_size), k_rnn),
        "b_ih_l0": u(ks[2], (hidden_size,), k_rnn),
        "b_hh_l0": u(ks[3], (hidden_size,), k_rnn),
        "W_ih_l1": u(ks[4], (hidden_size, hidden_size), k_rnn),
        "W_hh_l1": u(ks[5], (hidden_size, hidden_size), k_rnn),
        "b_ih_l1": u(ks[6], (hidden_size,), k_rnn),
        "b_hh_l1": u(ks[7], (hidden_size,), k_rnn),
        "W_fc":    u(ks[8], (1, hidden_size), k_fc),
        "b_fc":    u(ks[9], (1,), k_fc),
    }


if __name__ == "__main__":
    B, T, I, H = 2, 8, 1, 64          # batch, seq, input_size=1, hidden_size=64

    key = jax.random.PRNGKey(0)
    k_x, k_p = jax.random.split(key)
    x = jax.random.normal(k_x, (B, T, I), dtype=jnp.float32)
    params = init_params(k_p, I, H)

    out = price_rnn_forward(x, params)
    out = jax.block_until_ready(out)

    ref = price_rnn_reference(x, params)
    assert out.shape == (B, 1)
    assert jnp.allclose(out, ref, rtol=1e-5, atol=1e-4), (out, ref)

    print("KERNEL_OK")
</pallas_src>

<mosaic_0001>
module attributes {stable_mosaic.version = 11 : i64} {
  func.func @price_rnn_kernel(%arg0: memref<8x2x1xf32, #tpu.memory_space<vmem>>, %arg1: memref<1x128xf32, #tpu.memory_space<vmem>>, %arg2: memref<128x128xf32, #tpu.memory_space<vmem>>, %arg3: memref<1x128xf32, #tpu.memory_space<vmem>>, %arg4: memref<256x128xf32, #tpu.memory_space<vmem>>, %arg5: memref<1x128xf32, #tpu.memory_space<vmem>>, %arg6: memref<1x128xf32, #tpu.memory_space<vmem>>, %arg7: memref<1x1xf32, #tpu.memory_space<vmem>>, %arg8: memref<2x1xf32, #tpu.memory_space<vmem>>) attributes {dimension_semantics = [], scalar_prefetch = 0 : i64, scratch_operands = 0 : i64, tpu.core_type = #tpu.core_type<tc>} {
    %c0 = arith.constant 0 : index
    %c0_0 = arith.constant 0 : index
    %0 = vector.load %arg1[%c0, %c0_0] : memref<1x128xf32, #tpu.memory_space<vmem>>, vector<1x128xf32>
    %c0_1 = arith.constant 0 : index
    %c0_2 = arith.constant 0 : index
    %1 = vector.load %arg2[%c0_1, %c0_2] : memref<128x128xf32, #tpu.memory_space<vmem>>, vector<128x128xf32>
    %c0_3 = arith.constant 0 : index
    %c0_4 = arith.constant 0 : index
    %2 = vector.load %arg3[%c0_3, %c0_4] : memref<1x128xf32, #tpu.memory_space<vmem>>, vector<1x128xf32>
    %c0_5 = arith.constant 0 : index
    %c0_6 = arith.constant 0 : index
    %3 = vector.load %arg4[%c0_5, %c0_6] : memref<256x128xf32, #tpu.memory_space<vmem>>, vector<256x128xf32>
    %c0_7 = arith.constant 0 : index
    %c0_8 = arith.constant 0 : index
    %4 = vector.load %arg5[%c0_7, %c0_8] : memref<1x128xf32, #tpu.memory_space<vmem>>, vector<1x128xf32>
    %c0_9 = arith.constant 0 : index
    %c0_10 = arith.constant 0 : index
    %c0_11 = arith.constant 0 : index
    %5 = vector.load %arg0[%c0_9, %c0_10, %c0_11] : memref<8x2x1xf32, #tpu.memory_space<vmem>>, vector<1x2x1xf32>
    %6 = vector.shape_cast %5 : vector<1x2x1xf32> to vector<2x1xf32>
    %7 = vector.broadcast %6 : vector<2x1xf32> to vector<2x128xf32>
    %8 = vector.broadcast %0 : vector<1x128xf32> to vector<2x128xf32>
    %9 = arith.mulf %7, %8 : vector<2x128xf32>
    %10 = vector.broadcast %2 : vector<1x128xf32> to vector<2x128xf32>
    %11 = arith.addf %9, %10 : vector<2x128xf32>
    %c1 = arith.constant 1 : index
    %c0_12 = arith.constant 0 : index
    %c0_13 = arith.constant 0 : index
    %12 = vector.load %arg0[%c1, %c0_12, %c0_13] : memref<8x2x1xf32, #tpu.memory_space<vmem>>, vector<1x2x1xf32>
    %13 = vector.shape_cast %12 : vector<1x2x1xf32> to vector<2x1xf32>
    %14 = vector.broadcast %13 : vector<2x1xf32> to vector<2x128xf32>
    %15 = vector.broadcast %0 : vector<1x128xf32> to vector<2x128xf32>
    %16 = arith.mulf %14, %15 : vector<2x128xf32>
    %17 = vector.broadcast %2 : vector<1x128xf32> to vector<2x128xf32>
    %18 = arith.addf %16, %17 : vector<2x128xf32>
    %c2 = arith.constant 2 : index
    %c0_14 = arith.constant 0 : index
    %c0_15 = arith.constant 0 : index
    %19 = vector.load %arg0[%c2, %c0_14, %c0_15] : memref<8x2x1xf32, #tpu.memory_space<vmem>>, vector<1x2x1xf32>
    %20 = vector.shape_cast %19 : vector<1x2x1xf32> to vector<2x1xf32>
    %21 = vector.broadcast %20 : vector<2x1xf32> to vector<2x128xf32>
    %22 = vector.broadcast %0 : vector<1x128xf32> to vector<2x128xf32>
    %23 = arith.mulf %21, %22 : vector<2x128xf32>
    %24 = vector.broadcast %2 : vector<1x128xf32> to vector<2x128xf32>
    %25 = arith.addf %23, %24 : vector<2x128xf32>
    %c3 = arith.constant 3 : index
    %c0_16 = arith.constant 0 : index
    %c0_17 = arith.constant 0 : index
    %26 = vector.load %arg0[%c3, %c0_16, %c0_17] : memref<8x2x1xf32, #tpu.memory_space<vmem>>, vector<1x2x1xf32>
    %27 = vector.shape_cast %26 : vector<1x2x1xf32> to vector<2x1xf32>
    %28 = vector.broadcast %27 : vector<2x1xf32> to vector<2x128xf32>
    %29 = vector.broadcast %0 : vector<1x128xf32> to vector<2x128xf32>
    %30 = arith.mulf %28, %29 : vector<2x128xf32>
    %31 = vector.broadcast %2 : vector<1x128xf32> to vector<2x128xf32>
    %32 = arith.addf %30, %31 : vector<2x128xf32>
    %c4 = arith.constant 4 : index
    %c0_18 = arith.constant 0 : index
    %c0_19 = arith.constant 0 : index
    %33 = vector.load %arg0[%c4, %c0_18, %c0_19] : memref<8x2x1xf32, #tpu.memory_space<vmem>>, vector<1x2x1xf32>
    %34 = vector.shape_cast %33 : vector<1x2x1xf32> to vector<2x1xf32>
    %35 = vector.broadcast %34 : vector<2x1xf32> to vector<2x128xf32>
    %36 = vector.broadcast %0 : vector<1x128xf32> to vector<2x128xf32>
    %37 = arith.mulf %35, %36 : vector<2x128xf32>
    %38 = vector.broadcast %2 : vector<1x128xf32> to vector<2x128xf32>
    %39 = arith.addf %37, %38 : vector<2x128xf32>
    %c5 = arith.constant 5 : index
    %c0_20 = arith.constant 0 : index
    %c0_21 = arith.constant 0 : index
    %40 = vector.load %arg0[%c5, %c0_20, %c0_21] : memref<8x2x1xf32, #tpu.memory_space<vmem>>, vector<1x2x1xf32>
    %41 = vector.shape_cast %40 : vector<1x2x1xf32> to vector<2x1xf32>
    %42 = vector.broadcast %41 : vector<2x1xf32> to vector<2x128xf32>
    %43 = vector.broadcast %0 : vector<1x128xf32> to vector<2x128xf32>
    %44 = arith.mulf %42, %43 : vector<2x128xf32>
    %45 = vector.broadcast %2 : vector<1x128xf32> to vector<2x128xf32>
    %46 = arith.addf %44, %45 : vector<2x128xf32>
    %c6 = arith.constant 6 : index
    %c0_22 = arith.constant 0 : index
    %c0_23 = arith.constant 0 : index
    %47 = vector.load %arg0[%c6, %c0_22, %c0_23] : memref<8x2x1xf32, #tpu.memory_space<vmem>>, vector<1x2x1xf32>
    %48 = vector.shape_cast %47 : vector<1x2x1xf32> to vector<2x1xf32>
    %49 = vector.broadcast %48 : vector<2x1xf32> to vector<2x128xf32>
    %50 = vector.broadcast %0 : vector<1x128xf32> to vector<2x128xf32>
    %51 = arith.mulf %49, %50 : vector<2x128xf32>
    %52 = vector.broadcast %2 : vector<1x128xf32> to vector<2x128xf32>
    %53 = arith.addf %51, %52 : vector<2x128xf32>
    %c7 = arith.constant 7 : index
    %c0_24 = arith.constant 0 : index
    %c0_25 = arith.constant 0 : index
    %54 = vector.load %arg0[%c7, %c0_24, %c0_25] : memref<8x2x1xf32, #tpu.memory_space<vmem>>, vector<1x2x1xf32>
    %55 = vector.shape_cast %54 : vector<1x2x1xf32> to vector<2x1xf32>
    %56 = vector.broadcast %55 : vector<2x1xf32> to vector<2x128xf32>
    %57 = vector.broadcast %0 : vector<1x128xf32> to vector<2x128xf32>
    %58 = arith.mulf %56, %57 : vector<2x128xf32>
    %59 = vector.broadcast %2 : vector<1x128xf32> to vector<2x128xf32>
    %60 = arith.addf %58, %59 : vector<2x128xf32>
    %cst = arith.constant 0.000000e+00 : f32
    %61 = vector.broadcast %cst : f32 to vector<2x128xf32>
    %cst_26 = arith.constant 0.000000e+00 : f32
    %62 = vector.broadcast %cst_26 : f32 to vector<2x128xf32>
    %cst_27 = arith.constant dense<0.000000e+00> : vector<2x128xf32>
    %63 = tpu.matmul %61, %1, %cst_27 {dimension_numbers = #tpu.dot_dimension_numbers<[1], [0], [0], [1], [0, 0, 1, 1], [], []>} : vector<2x128xf32>, vector<128x128xf32>, vector<2x128xf32> -> vector<2x128xf32>
    %64 = arith.addf %11, %63 : vector<2x128xf32>
    %65 = math.tanh %64 : vector<2x128xf32>
    %66 = tpu.concatenate %65, %62 in 1 : vector<2x128xf32>, vector<2x128xf32> -> vector<2x256xf32>
    %cst_28 = arith.constant dense<0.000000e+00> : vector<2x128xf32>
    %67 = tpu.matmul %66, %3, %cst_28 {dimension_numbers = #tpu.dot_dimension_numbers<[1], [0], [0], [1], [0, 0, 1, 1], [], []>} : vector<2x256xf32>, vector<256x128xf32>, vector<2x128xf32> -> vector<2x128xf32>
    %68 = vector.broadcast %4 : vector<1x128xf32> to vector<2x128xf32>
    %69 = arith.addf %67, %68 : vector<2x128xf32>
    %70 = math.tanh %69 : vector<2x128xf32>
    %cst_29 = arith.constant dense<0.000000e+00> : vector<2x128xf32>
    %71 = tpu.matmul %65, %1, %cst_29 {dimension_numbers = #tpu.dot_dimension_numbers<[1], [0], [0], [1], [0, 0, 1, 1], [], []>} : vector<2x128xf32>, vector<128x128xf32>, vector<2x128xf32> -> vector<2x128xf32>
    %72 = arith.addf %18, %71 : vector<2x128xf32>
    %73 = math.tanh %72 : vector<2x128xf32>
    %74 = tpu.concatenate %73, %70 in 1 : vector<2x128xf32>, vector<2x128xf32> -> vector<2x256xf32>
    %cst_30 = arith.constant dense<0.000000e+00> : vector<2x128xf32>
    %75 = tpu.matmul %74, %3, %cst_30 {dimension_numbers = #tpu.dot_dimension_numbers<[1], [0], [0], [1], [0, 0, 1, 1], [], []>} : vector<2x256xf32>, vector<256x128xf32>, vector<2x128xf32> -> vector<2x128xf32>
    %76 = vector.broadcast %4 : vector<1x128xf32> to vector<2x128xf32>
    %77 = arith.addf %75, %76 : vector<2x128xf32>
    %78 = math.tanh %77 : vector<2x128xf32>
    %cst_31 = arith.constant dense<0.000000e+00> : vector<2x128xf32>
    %79 = tpu.matmul %73, %1, %cst_31 {dimension_numbers = #tpu.dot_dimension_numbers<[1], [0], [0], [1], [0, 0, 1, 1], [], []>} : vector<2x128xf32>, vector<128x128xf32>, vector<2x128xf32> -> vector<2x128xf32>
    %80 = arith.addf %25, %79 : vector<2x128xf32>
    %81 = math.tanh %80 : vector<2x128xf32>
    %82 = tpu.concatenate %81, %78 in 1 : vector<2x128xf32>, vector<2x128xf32> -> vector<2x256xf32>
    %cst_32 = arith.constant dense<0.000000e+00> : vector<2x128xf32>
    %83 = tpu.matmul %82, %3, %cst_32 {dimension_numbers = #tpu.dot_dimension_numbers<[1], [0], [0], [1], [0, 0, 1, 1], [], []>} : vector<2x256xf32>, vector<256x128xf32>, vector<2x128xf32> -> vector<2x128xf32>
    %84 = vector.broadcast %4 : vector<1x128xf32> to vector<2x128xf32>
    %85 = arith.addf %83, %84 : vector<2x128xf32>
    %86 = math.tanh %85 : vector<2x128xf32>
    %cst_33 = arith.constant dense<0.000000e+00> : vector<2x128xf32>
    %87 = tpu.matmul %81, %1, %cst_33 {dimension_numbers = #tpu.dot_dimension_numbers<[1], [0], [0], [1], [0, 0, 1, 1], [], []>} : vector<2x128xf32>, vector<128x128xf32>, vector<2x128xf32> -> vector<2x128xf32>
    %88 = arith.addf %32, %87 : vector<2x128xf32>
    %89 = math.tanh %88 : vector<2x128xf32>
    %90 = tpu.concatenate %89, %86 in 1 : vector<2x128xf32>, vector<2x128xf32> -> vector<2x256xf32>
    %cst_34 = arith.constant dense<0.000000e+00> : vector<2x128xf32>
    %91 = tpu.matmul %90, %3, %cst_34 {dimension_numbers = #tpu.dot_dimension_numbers<[1], [0], [0], [1], [0, 0, 1, 1], [], []>} : vector<2x256xf32>, vector<256x128xf32>, vector<2x128xf32> -> vector<2x128xf32>
    %92 = vector.broadcast %4 : vector<1x128xf32> to vector<2x128xf32>
    %93 = arith.addf %91, %92 : vector<2x128xf32>
    %94 = math.tanh %93 : vector<2x128xf32>
    %cst_35 = arith.constant dense<0.000000e+00> : vector<2x128xf32>
    %95 = tpu.matmul %89, %1, %cst_35 {dimension_numbers = #tpu.dot_dimension_numbers<[1], [0], [0], [1], [0, 0, 1, 1], [], []>} : vector<2x128xf32>, vector<128x128xf32>, vector<2x128xf32> -> vector<2x128xf32>
    %96 = arith.addf %39, %95 : vector<2x128xf32>
    %97 = math.tanh %96 : vector<2x128xf32>
    %98 = tpu.concatenate %97, %94 in 1 : vector<2x128xf32>, vector<2x128xf32> -> vector<2x256xf32>
    %cst_36 = arith.constant dense<0.000000e+00> : vector<2x128xf32>
    %99 = tpu.matmul %98, %3, %cst_36 {dimension_numbers = #tpu.dot_dimension_numbers<[1], [0], [0], [1], [0, 0, 1, 1], [], []>} : vector<2x256xf32>, vector<256x128xf32>, vector<2x128xf32> -> vector<2x128xf32>
    %100 = vector.broadcast %4 : vector<1x128xf32> to vector<2x128xf32>
    %101 = arith.addf %99, %100 : vector<2x128xf32>
    %102 = math.tanh %101 : vector<2x128xf32>
    %cst_37 = arith.constant dense<0.000000e+00> : vector<2x128xf32>
    %103 = tpu.matmul %97, %1, %cst_37 {dimension_numbers = #tpu.dot_dimension_numbers<[1], [0], [0], [1], [0, 0, 1, 1], [], []>} : vector<2x128xf32>, vector<128x128xf32>, vector<2x128xf32> -> vector<2x128xf32>
    %104 = arith.addf %46, %103 : vector<2x128xf32>
    %105 = math.tanh %104 : vector<2x128xf32>
    %106 = tpu.concatenate %105, %102 in 1 : vector<2x128xf32>, vector<2x128xf32> -> vector<2x256xf32>
    %cst_38 = arith.constant dense<0.000000e+00> : vector<2x128xf32>
    %107 = tpu.matmul %106, %3, %cst_38 {dimension_numbers = #tpu.dot_dimension_numbers<[1], [0], [0], [1], [0, 0, 1, 1], [], []>} : vector<2x256xf32>, vector<256x128xf32>, vector<2x128xf32> -> vector<2x128xf32>
    %108 = vector.broadcast %4 : vector<1x128xf32> to vector<2x128xf32>
    %109 = arith.addf %107, %108 : vector<2x128xf32>
    %110 = math.tanh %109 : vector<2x128xf32>
    %cst_39 = arith.constant dense<0.000000e+00> : vector<2x128xf32>
    %111 = tpu.matmul %105, %1, %cst_39 {dimension_numbers = #tpu.dot_dimension_numbers<[1], [0], [0], [1], [0, 0, 1, 1], [], []>} : vector<2x128xf32>, vector<128x128xf32>, vector<2x128xf32> -> vector<2x128xf32>
    %112 = arith.addf %53, %111 : vector<2x128xf32>
    %113 = math.tanh %112 : vector<2x128xf32>
    %114 = tpu.concatenate %113, %110 in 1 : vector<2x128xf32>, vector<2x128xf32> -> vector<2x256xf32>
    %cst_40 = arith.constant dense<0.000000e+00> : vector<2x128xf32>
    %115 = tpu.matmul %114, %3, %cst_40 {dimension_numbers = #tpu.dot_dimension_numbers<[1], [0], [0], [1], [0, 0, 1, 1], [], []>} : vector<2x256xf32>, vector<256x128xf32>, vector<2x128xf32> -> vector<2x128xf32>
    %116 = vector.broadcast %4 : vector<1x128xf32> to vector<2x128xf32>
    %117 = arith.addf %115, %116 : vector<2x128xf32>
    %118 = math.tanh %117 : vector<2x128xf32>
    %cst_41 = arith.constant dense<0.000000e+00> : vector<2x128xf32>
    %119 = tpu.matmul %113, %1, %cst_41 {dimension_numbers = #tpu.dot_dimension_numbers<[1], [0], [0], [1], [0, 0, 1, 1], [], []>} : vector<2x128xf32>, vector<128x128xf32>, vector<2x128xf32> -> vector<2x128xf32>
    %120 = arith.addf %60, %119 : vector<2x128xf32>
    %121 = math.tanh %120 : vector<2x128xf32>
    %122 = tpu.concatenate %121, %118 in 1 : vector<2x128xf32>, vector<2x128xf32> -> vector<2x256xf32>
    %cst_42 = arith.constant dense<0.000000e+00> : vector<2x128xf32>
    %123 = tpu.matmul %122, %3, %cst_42 {dimension_numbers = #tpu.dot_dimension_numbers<[1], [0], [0], [1], [0, 0, 1, 1], [], []>} : vector<2x256xf32>, vector<256x128xf32>, vector<2x128xf32> -> vector<2x128xf32>
    %124 = vector.broadcast %4 : vector<1x128xf32> to vector<2x128xf32>
    %125 = arith.addf %123, %124 : vector<2x128xf32>
    %126 = math.tanh %125 : vector<2x128xf32>
    %c0_43 = arith.constant 0 : index
    %c0_44 = arith.constant 0 : index
    %127 = vector.load %arg6[%c0_43, %c0_44] : memref<1x128xf32, #tpu.memory_space<vmem>>, vector<1x128xf32>
    %128 = vector.broadcast %127 : vector<1x128xf32> to vector<2x128xf32>
    %129 = arith.mulf %126, %128 : vector<2x128xf32>
    %cst_45 = arith.constant dense<0.000000e+00> : vector<2xf32>
    %130 = vector.multi_reduction <add>, %129, %cst_45 [1] : vector<2x128xf32> to vector<2xf32>
    %131 = vector.shape_cast %130 : vector<2xf32> to vector<2x1xf32>
    %c0_46 = arith.constant 0 : index
    %c0_47 = arith.constant 0 : index
    %132 = vector.load %arg7[%c0_46, %c0_47] : memref<1x1xf32, #tpu.memory_space<vmem>>, vector<1x1xf32>
    %133 = vector.broadcast %132 : vector<1x1xf32> to vector<2x1xf32>
    %134 = arith.addf %131, %133 : vector<2x1xf32>
    %c0_48 = arith.constant 0 : index
    %c0_49 = arith.constant 0 : index
    %135 = vector.load %arg8[%c0_48, %c0_49] : memref<2x1xf32, #tpu.memory_space<vmem>>, vector<2x1xf32>
    tpu.vector_store %arg8[%c0_48, %c0_49], %134 {strides = array<i32>} : memref<2x1xf32, #tpu.memory_space<vmem>>, vector<2x1xf32>,
    return
  }
}

</mosaic_0001>

<llo_original>
// kernel: tpu_custom_call.1
$region0: #{tpu_custom_call.1}
  #allocation0 [shape = 'u32[]', space=smem, size = 0x4, offset = 0x4, fixed_abs, tag = 'smem constant byte address 0x4 - core index']
  #allocation1 [shape = 'u32[144,128]{1,0:T(1,128)}', space=vmem, size = 0x12000, scoped, tag = 'internal scratch']
  #allocation2 [shape = 'f32[1,1]{1,0:T(1,128)S(1)}', space=vmem, size = 0x200, scoped, tag = 'scoped memory for tpu_custom_call.1']
  %s0 = inlined_call_operand.vmem [shape: f32[8,2,1], index: 0, kind: input, shape index: {}]
  %s1 = inlined_call_operand.vmem [shape: f32[1,128], index: 1, kind: input, shape index: {}]
  %s2 = inlined_call_operand.hbm [shape: f32[128,128], index: 2, kind: input, shape index: {}]
  %s3 = inlined_call_operand.vmem [shape: f32[1,128], index: 3, kind: input, shape index: {}]
  %s4 = inlined_call_operand.hbm [shape: f32[256,128], index: 4, kind: input, shape index: {}]
  %s5 = inlined_call_operand.vmem [shape: f32[1,128], index: 5, kind: input, shape index: {}]
  %s6 = inlined_call_operand.vmem [shape: f32[1,128], index: 6, kind: input, shape index: {}]
  %s7 = inlined_call_operand.<no memory space> [shape: f32[1,1], index: 7, kind: input, shape index: {}]
  %s8 = inlined_call_operand.vmem [shape: f32[2,1], index: 8, kind: output, shape index: {}]
  %s9 = sld [smem:[#allocation0]]
  $region50: #{tpu_custom_call.1} parent=0
    _
  %s11 = ssub.s32 1, %s9
  %s12 = scalar_select 0, %s11, %s9
  %v13 = vstv %s7
  %14 = vst [vmem:[#allocation2] sm:$0x1] %v13
  $region1: #{tpu_custom_call.1} parent=0
    #allocation3 [shape = 'u8[65536]{0}', space=vmem, size = 0x10000, scoped, tag = 'input window, operand 2, single buffered']
    #allocation4 [shape = 's32[1]{0}', space=sflag, size = 0x4, scoped, tag = 'scoped memory for tpu_custom_call.1']
    #allocation5 [shape = 'u8[131072]{0}', space=vmem, size = 0x20000, scoped, tag = 'input window, operand 4, single buffered']
    #allocation6 [shape = 's32[1]{0}', space=sflag, size = 0x4, scoped, tag = 'scoped memory for tpu_custom_call.1']
    %15 = vsyncpa [#allocation4], 0
    %16 = vsyncpa [#allocation6], 0
    // Predicated region
    $region2: #{tpu_custom_call.1} parent=1 // pred_check
      _
    $region3: #{tpu_custom_call.1} parent=1 // pred_check_branch
      %18 = sbr.rel (0) target = $region5
    $region4: #{tpu_custom_call.1} parent=1 // pred_region
      _
    $region5: #{tpu_custom_call.1} parent=1 // pred_fallthru
      _
    // Predicated region
    $region6: #{tpu_custom_call.1} parent=1 // pred_check
      _
    $region7: #{tpu_custom_call.1} parent=1 // pred_check_branch
      %20 = sbr.rel (0) target = $region9
    $region8: #{tpu_custom_call.1} parent=1 // pred_region
      _
    $region9: #{tpu_custom_call.1} parent=1 // pred_fallthru
      _
    // Predicated region
    $region10: #{tpu_custom_call.1} parent=1 // pred_check
      _
    $region11: #{tpu_custom_call.1} parent=1 // pred_check_branch
      %22 = sbr.rel (0) target = $region13
    $region12: #{tpu_custom_call.1} parent=1 // pred_region
      %s24 = ssub.s32 2048, 2048
      %25 = vsyncadd [#allocation4], %s24
      %s26 = sshll.u32 [#allocation3], 4
      %s27 = int_to_ptr.vmem [resolvable:$true] %s26
      %32 = dma.hbm_to_vmem [thread:$0]  %s2, 2048, %s27, [#allocation4], 128, 128, 8
    $region13: #{tpu_custom_call.1} parent=1 // pred_fallthru
      _
    // Predicated region
    $region14: #{tpu_custom_call.1} parent=1 // pred_check
      _
    $region15: #{tpu_custom_call.1} parent=1 // pred_check_branch
      %34 = sbr.rel (0) target = $region17
    $region16: #{tpu_custom_call.1} parent=1 // pred_region
      _
    $region17: #{tpu_custom_call.1} parent=1 // pred_fallthru
      _
    // Predicated region
    $region18: #{tpu_custom_call.1} parent=1 // pred_check
      _
    $region19: #{tpu_custom_call.1} parent=1 // pred_check_branch
      %36 = sbr.rel (0) target = $region21
    $region20: #{tpu_custom_call.1} parent=1 // pred_region
      %s38 = ssub.s32 4096, 4096
      %39 = vsyncadd [#allocation6], %s38
      %s40 = sshll.u32 [#allocation5], 4
      %s41 = int_to_ptr.vmem [resolvable:$true] %s40
      %46 = dma.hbm_to_vmem [thread:$0]  %s4, 4096, %s41, [#allocation6], 128, 128, 8
    $region21: #{tpu_custom_call.1} parent=1 // pred_fallthru
      _
    // Predicated region
    $region22: #{tpu_custom_call.1} parent=1 // pred_check
      _
    $region23: #{tpu_custom_call.1} parent=1 // pred_check_branch
      %48 = sbr.rel (0) target = $region25
    $region24: #{tpu_custom_call.1} parent=1 // pred_region
      _
    $region25: #{tpu_custom_call.1} parent=1 // pred_fallthru
      _
    // Predicated region
    $region26: #{tpu_custom_call.1} parent=1 // pred_check
      _
    $region27: #{tpu_custom_call.1} parent=1 // pred_check_branch
      %50 = sbr.rel (0) target = $region29
    $region28: #{tpu_custom_call.1} parent=1 // pred_region
      _
    $region29: #{tpu_custom_call.1} parent=1 // pred_fallthru
      _
    // Predicated region
    $region30: #{tpu_custom_call.1} parent=1 // pred_check
      _
    $region31: #{tpu_custom_call.1} parent=1 // pred_check_branch
      %52 = sbr.rel (0) target = $region33
    $region32: #{tpu_custom_call.1} parent=1 // pred_region
      _
    $region33: #{tpu_custom_call.1} parent=1 // pred_fallthru
      _
    // Predicated region
    $region34: #{tpu_custom_call.1} parent=1 // pred_check
      _
    $region35: #{tpu_custom_call.1} parent=1 // pred_check_branch
      %54 = sbr.rel (0) target = $region37
    $region36: #{tpu_custom_call.1} parent=1 // pred_region
      %55 = dma.done [#allocation4], 2048
    $region37: #{tpu_custom_call.1} parent=1 // pred_fallthru
      _
    // Predicated region
    $region38: #{tpu_custom_call.1} parent=1 // pred_check
      _
    $region39: #{tpu_custom_call.1} parent=1 // pred_check_branch
      %57 = sbr.rel (0) target = $region41
    $region40: #{tpu_custom_call.1} parent=1 // pred_region
      %58 = dma.done [#allocation6], 4096
    $region41: #{tpu_custom_call.1} parent=1 // pred_fallthru
      _
    %v59 = vld [vmem:[%s1] sm:$0x1]
    %v60 = vld [vmem:[#allocation3] sm:$0xff]
    %v61 = vld [vmem:[#allocation3 + $0x8] sm:$0xff]
    %v62 = vld [vmem:[#allocation3 + $0x10] sm:$0xff]
    %v63 = vld [vmem:[#allocation3 + $0x18] sm:$0xff]
    %v64 = vld [vmem:[#allocation3 + $0x20] sm:$0xff]
    %v65 = vld [vmem:[#allocation3 + $0x28] sm:$0xff]
    %v66 = vld [vmem:[#allocation3 + $0x30] sm:$0xff]
    %v67 = vld [vmem:[#allocation3 + $0x38] sm:$0xff]
    %v68 = vld [vmem:[#allocation3 + $0x40] sm:$0xff]
    %v69 = vld [vmem:[#allocation3 + $0x48] sm:$0xff]
    %v70 = vld [vmem:[#allocation3 + $0x50] sm:$0xff]
    %v71 = vld [vmem:[#allocation3 + $0x58] sm:$0xff]
    %v72 = vld [vmem:[#allocation3 + $0x60] sm:$0xff]
    %v73 = vld [vmem:[#allocation3 + $0x68] sm:$0xff]
    %v74 = vld [vmem:[#allocation3 + $0x70] sm:$0xff]
    %v75 = vld [vmem:[#allocation3 + $0x78] sm:$0xff]
    %v76 = vld [vmem:[%s3] sm:$0x1]
    %v77 = vld [vmem:[#allocation5] sm:$0xff]
    %v78 = vld [vmem:[#allocation5 + $0x8] sm:$0xff]
    %v79 = vld [vmem:[#allocation5 + $0x10] sm:$0xff]
    %v80 = vld [vmem:[#allocation5 + $0x18] sm:$0xff]
    %v81 = vld [vmem:[#allocation5 + $0x20] sm:$0xff]
    %v82 = vld [vmem:[#allocation5 + $0x28] sm:$0xff]
    %v83 = vld [vmem:[#allocation5 + $0x30] sm:$0xff]
    %v84 = vld [vmem:[#allocation5 + $0x38] sm:$0xff]
    %v85 = vld [vmem:[#allocation5 + $0x40] sm:$0xff]
    %v86 = vld [vmem:[#allocation5 + $0x48] sm:$0xff]
    %v87 = vld [vmem:[#allocation5 + $0x50] sm:$0xff]
    %v88 = vld [vmem:[#allocation5 + $0x58] sm:$0xff]
    %v89 = vld [vmem:[#allocation5 + $0x60] sm:$0xff]
    %v90 = vld [vmem:[#allocation5 + $0x68] sm:$0xff]
    %v91 = vld [vmem:[#allocation5 + $0x70] sm:$0xff]
    %v92 = vld [vmem:[#allocation5 + $0x78] sm:$0xff]
    %v93 = vld [vmem:[#allocation5 + $0x80] sm:$0xff]
    %v94 = vld [vmem:[#allocation5 + $0x88] sm:$0xff]
    %v95 = vld [vmem:[#allocation5 + $0x90] sm:$0xff]
    %v96 = vld [vmem:[#allocation5 + $0x98] sm:$0xff]
    %v97 = vld [vmem:[#allocation5 + $0xa0] sm:$0xff]
    %v98 = vld [vmem:[#allocation5 + $0xa8] sm:$0xff]
    %v99 = vld [vmem:[#allocation5 + $0xb0] sm:$0xff]
    %v100 = vld [vmem:[#allocation5 + $0xb8] sm:$0xff]
    %v101 = vld [vmem:[#allocation5 + $0xc0] sm:$0xff]
    %v102 = vld [vmem:[#allocation5 + $0xc8] sm:$0xff]
    %v103 = vld [vmem:[#allocation5 + $0xd0] sm:$0xff]
    %v104 = vld [vmem:[#allocation5 + $0xd8] sm:$0xff]
    %v105 = vld [vmem:[#allocation5 + $0xe0] sm:$0xff]
    %v106 = vld [vmem:[#allocation5 + $0xe8] sm:$0xff]
    %v107 = vld [vmem:[#allocation5 + $0xf0] sm:$0xff]
    %v108 = vld [vmem:[#allocation5 + $0xf8] sm:$0xff]
    %v109 = vld [vmem:[%s5] sm:$0x1]
    %v110 = vld [vmem:[%s0] sm:$0x3]
    %112 = vset.pattern.permute.xlu0 0
    %113 = vperm.xlu0 %112, %v110
    %v114 = vpop.permute.xlu0 %113
    %v117 = vlaneseq
    %v118 = vshrl.u32 %v117, 7
    %v119 = vsub.s32 0, %v118
    %v120 = vrot.slane %v59, %v119
    %v122 = vmul.f32 %v114, %v120
    %v124 = vlaneseq
    %v125 = vshrl.u32 %v124, 7
    %v126 = vsub.s32 0, %v125
    %v127 = vrot.slane %v76, %v126
    %v129 = vadd.f32 %v122, %v127
    %s130 = scalar_lea.vmem %s0, 2
    %v131 = vld [vmem:[%s130] sm:$0x3]
    %133 = vset.pattern.permute.xlu0 0
    %134 = vperm.xlu0 %133, %v131
    %v135 = vpop.permute.xlu0 %134
    %v137 = vmul.f32 %v135, %v120
    %v138 = vadd.f32 %v137, %v127
    %s139 = scalar_lea.vmem %s0, 4
    %v140 = vld [vmem:[%s139] sm:$0x3]
    %142 = vset.pattern.permute.xlu0 0
    %143 = vperm.xlu0 %142, %v140
    %v144 = vpop.permute.xlu0 %143
    %v146 = vmul.f32 %v144, %v120
    %v147 = vadd.f32 %v146, %v127
    %s148 = scalar_lea.vmem %s0, 6
    %v149 = vld [vmem:[%s148] sm:$0x3]
    %151 = vset.pattern.permute.xlu0 0
    %152 = vperm.xlu0 %151, %v149
    %v153 = vpop.permute.xlu0 %152
    %v155 = vmul.f32 %v153, %v120
    %v156 = vadd.f32 %v155, %v127
    %s157 = scalar_lea.vmem %s0, 8
    %v158 = vld [vmem:[%s157] sm:$0x3]
    %160 = vset.pattern.permute.xlu0 0
    %161 = vperm.xlu0 %160, %v158
    %v162 = vpop.permute.xlu0 %161
    %v164 = vmul.f32 %v162, %v120
    %v165 = vadd.f32 %v164, %v127
    %s166 = scalar_lea.vmem %s0, 10
    %v167 = vld [vmem:[%s166] sm:$0x3]
    %169 = vset.pattern.permute.xlu0 0
    %170 = vperm.xlu0 %169, %v167
    %v171 = vpop.permute.xlu0 %170
    %v173 = vmul.f32 %v171, %v120
    %v174 = vadd.f32 %v173, %v127
    %s175 = scalar_lea.vmem %s0, 12
    %v176 = vld [vmem:[%s175] sm:$0x3]
    %178 = vset.pattern.permute.xlu0 0
    %179 = vperm.xlu0 %178, %v176
    %v180 = vpop.permute.xlu0 %179
    %v182 = vmul.f32 %v180, %v120
    %v183 = vadd.f32 %v182, %v127
    %s184 = scalar_lea.vmem %s0, 14
    %v185 = vld [vmem:[%s184] sm:$0x3]
    %187 = vset.pattern.permute.xlu0 0
    %188 = vperm.xlu0 %187, %v185
    %v189 = vpop.permute.xlu0 %188
    %v191 = vmul.f32 %v189, %v120
    %v192 = vadd.f32 %v191, %v127
    %193 = vmatprep.subr.mxu0 0.0
    %194 = vmatpush1.msra.mxu0 %v75
    %195 = vmatprep.subr.mxu0 0.0
    %196 = vmatpush1.msra.mxu0 %v74
    %197 = vmatprep.subr.mxu0 0.0
    %198 = vmatpush1.msra.mxu0 %v73
    %199 = vmatprep.subr.mxu0 0.0
    %200 = vmatpush1.msra.mxu0 %v72
    %201 = vmatprep.subr.mxu0 0.0
    %202 = vmatpush1.msra.mxu0 %v71
    %203 = vmatprep.subr.mxu0 0.0
    %204 = vmatpush1.msra.mxu0 %v70
    %205 = vmatprep.subr.mxu0 0.0
    %206 = vmatpush1.msra.mxu0 %v69
    %207 = vmatprep.subr.mxu0 0.0
    %208 = vmatpush1.msra.mxu0 %v68
    %209 = vmatprep.subr.mxu0 0.0
    %210 = vmatpush1.msra.mxu0 %v67
    %211 = vmatprep.subr.mxu0 0.0
    %212 = vmatpush1.msra.mxu0 %v66
    %213 = vmatprep.subr.mxu0 0.0
    %214 = vmatpush1.msra.mxu0 %v65
    %215 = vmatprep.subr.mxu0 0.0
    %216 = vmatpush1.msra.mxu0 %v64
    %217 = vmatprep.subr.mxu0 0.0
    %218 = vmatpush1.msra.mxu0 %v63
    %219 = vmatprep.subr.mxu0 0.0
    %220 = vmatpush1.msra.mxu0 %v62
    %221 = vmatprep.subr.mxu0 0.0
    %222 = vmatpush1.msra.mxu0 %v61
    %223 = vmatprep.subr.mxu0 0.0
    %224 = vmatpush1.msra.mxu0 %v60
    %225 = vmatprep.subr.mxu0 0.0
    %226 = vmatpush2.msra.mxu0 0.0
    %227 = vmatprep.subr.mxu0 0.0
    %228 = vmatpush2.msra.mxu0 0.0
    %229 = vmatprep.subr.mxu0 0.0
    %230 = vmatpush2.msra.mxu0 0.0
    %231 = vmatprep.subr.mxu0 0.0
    %232 = vmatpush2.msra.mxu0 0.0
    %233 = vmatprep.subr.mxu0 0.0
    %234 = vmatpush2.msra.mxu0 0.0
    %235 = vmatprep.subr.mxu0 0.0
    %236 = vmatpush2.msra.mxu0 0.0
    %237 = vmatprep.subr.mxu0 0.0
    %238 = vmatpush2.msra.mxu0 0.0
    %239 = vmatprep.subr.mxu0 0.0
    %240 = vmatpush2.msra.mxu0 0.0
    %241 = vmatprep.subr.mxu0 0.0
    %242 = vmatpush2.msra.mxu0 0.0
    %243 = vmatprep.subr.mxu0 0.0
    %244 = vmatpush2.msra.mxu0 0.0
    %245 = vmatprep.subr.mxu0 0.0
    %246 = vmatpush2.msra.mxu0 0.0
    %247 = vmatprep.subr.mxu0 0.0
    %248 = vmatpush2.msra.mxu0 0.0
    %249 = vmatprep.subr.mxu0 0.0
    %250 = vmatpush2.msra.mxu0 0.0
    %251 = vmatprep.subr.mxu0 0.0
    %252 = vmatpush2.msra.mxu0 0.0
    %253 = vmatprep.subr.mxu0 0.0
    %254 = vmatpush2.msra.mxu0 0.0
    %255 = vmatprep.subr.mxu0 0.0
    %256 = vmatpush2.msra.mxu0 0.0
    %257 = vmatprep.mubr.f32.mxu0 0.0
    %258 = vmatmul.mubr.f32.gmra.mxu0 0.0
    %v259 = vpop.f32.mrf.mxu0
    %v260 = vadd.f32 0.0, %v259
    %v261 = vpop.f32.mrf.mxu0
    %262 = vdwg.mxu0
    %v263 = vadd.f32 %v129, %v260
    %v264 = vtanh.pop %v263
    %v266 = vlaneseq
    %v267 = vshrl.u32 %v266, 7
    %v268 = vsub.s32 0, %v267
    %v269 = vrot.slane %v109, %v268
    %271 = vmatprep.subr.mxu0 0.0
    %272 = vmatpush1.msra.mxu0 %v92
    %273 = vmatprep.subr.mxu0 0.0
    %274 = vmatpush1.msra.mxu0 %v91
    %275 = vmatprep.subr.mxu0 0.0
    %276 = vmatpush1.msra.mxu0 %v90
    %277 = vmatprep.subr.mxu0 0.0
    %278 = vmatpush1.msra.mxu0 %v89
    %279 = vmatprep.subr.mxu0 0.0
    %280 = vmatpush1.msra.mxu0 %v88
    %281 = vmatprep.subr.mxu0 0.0
    %282 = vmatpush1.msra.mxu0 %v87
    %283 = vmatprep.subr.mxu0 0.0
    %284 = vmatpush1.msra.mxu0 %v86
    %285 = vmatprep.subr.mxu0 0.0
    %286 = vmatpush1.msra.mxu0 %v85
    %287 = vmatprep.subr.mxu0 0.0
    %288 = vmatpush1.msra.mxu0 %v84
    %289 = vmatprep.subr.mxu0 0.0
    %290 = vmatpush1.msra.mxu0 %v83
    %291 = vmatprep.subr.mxu0 0.0
    %292 = vmatpush1.msra.mxu0 %v82
    %293 = vmatprep.subr.mxu0 0.0
    %294 = vmatpush1.msra.mxu0 %v81
    %295 = vmatprep.subr.mxu0 0.0
    %296 = vmatpush1.msra.mxu0 %v80
    %297 = vmatprep.subr.mxu0 0.0
    %298 = vmatpush1.msra.mxu0 %v79
    %299 = vmatprep.subr.mxu0 0.0
    %300 = vmatpush1.msra.mxu0 %v78
    %301 = vmatprep.subr.mxu0 0.0
    %302 = vmatpush1.msra.mxu0 %v77
    %303 = vmatprep.subr.mxu0 0.0
    %304 = vmatpush2.msra.mxu0 %v108
    %305 = vmatprep.subr.mxu0 0.0
    %306 = vmatpush2.msra.mxu0 %v107
    %307 = vmatprep.subr.mxu0 0.0
    %308 = vmatpush2.msra.mxu0 %v106
    %309 = vmatprep.subr.mxu0 0.0
    %310 = vmatpush2.msra.mxu0 %v105
    %311 = vmatprep.subr.mxu0 0.0
    %312 = vmatpush2.msra.mxu0 %v104
    %313 = vmatprep.subr.mxu0 0.0
    %314 = vmatpush2.msra.mxu0 %v103
    %315 = vmatprep.subr.mxu0 0.0
    %316 = vmatpush2.msra.mxu0 %v102
    %317 = vmatprep.subr.mxu0 0.0
    %318 = vmatpush2.msra.mxu0 %v101
    %319 = vmatprep.subr.mxu0 0.0
    %320 = vmatpush2.msra.mxu0 %v100
    %321 = vmatprep.subr.mxu0 0.0
    %322 = vmatpush2.msra.mxu0 %v99
    %323 = vmatprep.subr.mxu0 0.0
    %324 = vmatpush2.msra.mxu0 %v98
    %325 = vmatprep.subr.mxu0 0.0
    %326 = vmatpush2.msra.mxu0 %v97
    %327 = vmatprep.subr.mxu0 0.0
    %328 = vmatpush2.msra.mxu0 %v96
    %329 = vmatprep.subr.mxu0 0.0
    %330 = vmatpush2.msra.mxu0 %v95
    %331 = vmatprep.subr.mxu0 0.0
    %332 = vmatpush2.msra.mxu0 %v94
    %333 = vmatprep.subr.mxu0 0.0
    %334 = vmatpush2.msra.mxu0 %v93
    %335 = vmatprep.mubr.f32.mxu0 0.0
    %336 = vmatmul.mubr.f32.gmra.mxu0 %v264
    %v337 = vpop.f32.mrf.mxu0
    %v338 = vadd.f32 %v269, %v337
    %v339 = vpop.f32.mrf.mxu0
    %340 = vdwg.mxu0
    %v341 = vtanh.pop %v338
    %342 = vmatprep.subr.mxu0 0.0
    %343 = vmatpush1.msra.mxu0 %v75
    %344 = vmatprep.subr.mxu0 0.0
    %345 = vmatpush1.msra.mxu0 %v74
    %346 = vmatprep.subr.mxu0 0.0
    %347 = vmatpush1.msra.mxu0 %v73
    %348 = vmatprep.subr.mxu0 0.0
    %349 = vmatpush1.msra.mxu0 %v72
    %350 = vmatprep.subr.mxu0 0.0
    %351 = vmatpush1.msra.mxu0 %v71
    %352 = vmatprep.subr.mxu0 0.0
    %353 = vmatpush1.msra.mxu0 %v70
    %354 = vmatprep.subr.mxu0 0.0
    %355 = vmatpush1.msra.mxu0 %v69
    %356 = vmatprep.subr.mxu0 0.0
    %357 = vmatpush1.msra.mxu0 %v68
    %358 = vmatprep.subr.mxu0 0.0
    %359 = vmatpush1.msra.mxu0 %v67
    %360 = vmatprep.subr.mxu0 0.0
    %361 = vmatpush1.msra.mxu0 %v66
    %362 = vmatprep.subr.mxu0 0.0
    %363 = vmatpush1.msra.mxu0 %v65
    %364 = vmatprep.subr.mxu0 0.0
    %365 = vmatpush1.msra.mxu0 %v64
    %366 = vmatprep.subr.mxu0 0.0
    %367 = vmatpush1.msra.mxu0 %v63
    %368 = vmatprep.subr.mxu0 0.0
    %369 = vmatpush1.msra.mxu0 %v62
    %370 = vmatprep.subr.mxu0 0.0
    %371 = vmatpush1.msra.mxu0 %v61
    %372 = vmatprep.subr.mxu0 0.0
    %373 = vmatpush1.msra.mxu0 %v60
    %374 = vmatprep.subr.mxu0 0.0
    %375 = vmatpush2.msra.mxu0 0.0
    %376 = vmatprep.subr.mxu0 0.0
    %377 = vmatpush2.msra.mxu0 0.0
    %378 = vmatprep.subr.mxu0 0.0
    %379 = vmatpush2.msra.mxu0 0.0
    %380 = vmatprep.subr.mxu0 0.0
    %381 = vmatpush2.msra.mxu0 0.0
    %382 = vmatprep.subr.mxu0 0.0
    %383 = vmatpush2.msra.mxu0 0.0
    %384 = vmatprep.subr.mxu0 0.0
    %385 = vmatpush2.msra.mxu0 0.0
    %386 = vmatprep.subr.mxu0 0.0
    %387 = vmatpush2.msra.mxu0 0.0
    %388 = vmatprep.subr.mxu0 0.0
    %389 = vmatpush2.msra.mxu0 0.0
    %390 = vmatprep.subr.mxu0 0.0
    %391 = vmatpush2.msra.mxu0 0.0
    %392 = vmatprep.subr.mxu0 0.0
    %393 = vmatpush2.msra.mxu0 0.0
    %394 = vmatprep.subr.mxu0 0.0
    %395 = vmatpush2.msra.mxu0 0.0
    %396 = vmatprep.subr.mxu0 0.0
    %397 = vmatpush2.msra.mxu0 0.0
    %398 = vmatprep.subr.mxu0 0.0
    %399 = vmatpush2.msra.mxu0 0.0
    %400 = vmatprep.subr.mxu0 0.0
    %401 = vmatpush2.msra.mxu0 0.0
    %402 = vmatprep.subr.mxu0 0.0
    %403 = vmatpush2.msra.mxu0 0.0
    %404 = vmatprep.subr.mxu0 0.0
    %405 = vmatpush2.msra.mxu0 0.0
    %406 = vmatprep.mubr.f32.mxu0 0.0
    %407 = vmatmul.mubr.f32.gmra.mxu0 %v264
    %v408 = vpop.f32.mrf.mxu0
    %v409 = vadd.f32 0.0, %v408
    %v410 = vpop.f32.mrf.mxu0
    %411 = vdwg.mxu0
    %v412 = vadd.f32 %v138, %v409
    %v413 = vtanh.pop %v412
    %414 = vmatprep.subr.mxu0 0.0
    %415 = vmatpush1.msra.mxu0 %v92
    %416 = vmatprep.subr.mxu0 0.0
    %417 = vmatpush1.msra.mxu0 %v91
    %418 = vmatprep.subr.mxu0 0.0
    %419 = vmatpush1.msra.mxu0 %v90
    %420 = vmatprep.subr.mxu0 0.0
    %421 = vmatpush1.msra.mxu0 %v89
    %422 = vmatprep.subr.mxu0 0.0
    %423 = vmatpush1.msra.mxu0 %v88
    %424 = vmatprep.subr.mxu0 0.0
    %425 = vmatpush1.msra.mxu0 %v87
    %426 = vmatprep.subr.mxu0 0.0
    %427 = vmatpush1.msra.mxu0 %v86
    %428 = vmatprep.subr.mxu0 0.0
    %429 = vmatpush1.msra.mxu0 %v85
    %430 = vmatprep.subr.mxu0 0.0
    %431 = vmatpush1.msra.mxu0 %v84
    %432 = vmatprep.subr.mxu0 0.0
    %433 = vmatpush1.msra.mxu0 %v83
    %434 = vmatprep.subr.mxu0 0.0
    %435 = vmatpush1.msra.mxu0 %v82
    %436 = vmatprep.subr.mxu0 0.0
    %437 = vmatpush1.msra.mxu0 %v81
    %438 = vmatprep.subr.mxu0 0.0
    %439 = vmatpush1.msra.mxu0 %v80
    %440 = vmatprep.subr.mxu0 0.0
    %441 = vmatpush1.msra.mxu0 %v79
    %442 = vmatprep.subr.mxu0 0.0
    %443 = vmatpush1.msra.mxu0 %v78
    %444 = vmatprep.subr.mxu0 0.0
    %445 = vmatpush1.msra.mxu0 %v77
    %446 = vmatprep.subr.mxu0 0.0
    %447 = vmatpush2.msra.mxu0 %v108
    %448 = vmatprep.subr.mxu0 0.0
    %449 = vmatpush2.msra.mxu0 %v107
    %450 = vmatprep.subr.mxu0 0.0
    %451 = vmatpush2.msra.mxu0 %v106
    %452 = vmatprep.subr.mxu0 0.0
    %453 = vmatpush2.msra.mxu0 %v105
    %454 = vmatprep.subr.mxu0 0.0
    %455 = vmatpush2.msra.mxu0 %v104
    %456 = vmatprep.subr.mxu0 0.0
    %457 = vmatpush2.msra.mxu0 %v103
    %458 = vmatprep.subr.mxu0 0.0
    %459 = vmatpush2.msra.mxu0 %v102
    %460 = vmatprep.subr.mxu0 0.0
    %461 = vmatpush2.msra.mxu0 %v101
    %462 = vmatprep.subr.mxu0 0.0
    %463 = vmatpush2.msra.mxu0 %v100
    %464 = vmatprep.subr.mxu0 0.0
    %465 = vmatpush2.msra.mxu0 %v99
    %466 = vmatprep.subr.mxu0 0.0
    %467 = vmatpush2.msra.mxu0 %v98
    %468 = vmatprep.subr.mxu0 0.0
    %469 = vmatpush2.msra.mxu0 %v97
    %470 = vmatprep.subr.mxu0 0.0
    %471 = vmatpush2.msra.mxu0 %v96
    %472 = vmatprep.subr.mxu0 0.0
    %473 = vmatpush2.msra.mxu0 %v95
    %474 = vmatprep.subr.mxu0 0.0
    %475 = vmatpush2.msra.mxu0 %v94
    %476 = vmatprep.subr.mxu0 0.0
    %477 = vmatpush2.msra.mxu0 %v93
    %478 = vmatprep.mubr.f32.mxu0 %v341
    %479 = vmatmul.mubr.f32.gmra.mxu0 %v413
    %v480 = vpop.f32.mrf.mxu0
    %v481 = vadd.f32 %v269, %v480
    %v482 = vpop.f32.mrf.mxu0
    %483 = vdwg.mxu0
    %v484 = vtanh.pop %v481
    %485 = vmatprep.subr.mxu0 0.0
    %486 = vmatpush1.msra.mxu0 %v75
    %487 = vmatprep.subr.mxu0 0.0
    %488 = vmatpush1.msra.mxu0 %v74
    %489 = vmatprep.subr.mxu0 0.0
    %490 = vmatpush1.msra.mxu0 %v73
    %491 = vmatprep.subr.mxu0 0.0
    %492 = vmatpush1.msra.mxu0 %v72
    %493 = vmatprep.subr.mxu0 0.0
    %494 = vmatpush1.msra.mxu0 %v71
    %495 = vmatprep.subr.mxu0 0.0
    %496 = vmatpush1.msra.mxu0 %v70
    %497 = vmatprep.subr.mxu0 0.0
    %498 = vmatpush1.msra.mxu0 %v69
    %499 = vmatprep.subr.mxu0 0.0
    %500 = vmatpush1.msra.mxu0 %v68
    %501 = vmatprep.subr.mxu0 0.0
    %502 = vmatpush1.msra.mxu0 %v67
    %503 = vmatprep.subr.mxu0 0.0
    %504 = vmatpush1.msra.mxu0 %v66
    %505 = vmatprep.subr.mxu0 0.0
    %506 = vmatpush1.msra.mxu0 %v65
    %507 = vmatprep.subr.mxu0 0.0
    %508 = vmatpush1.msra.mxu0 %v64
    %509 = vmatprep.subr.mxu0 0.0
    %510 = vmatpush1.msra.mxu0 %v63
    %511 = vmatprep.subr.mxu0 0.0
    %512 = vmatpush1.msra.mxu0 %v62
    %513 = vmatprep.subr.mxu0 0.0
    %514 = vmatpush1.msra.mxu0 %v61
    %515 = vmatprep.subr.mxu0 0.0
    %516 = vmatpush1.msra.mxu0 %v60
    %517 = vmatprep.subr.mxu0 0.0
    %518 = vmatpush2.msra.mxu0 0.0
    %519 = vmatprep.subr.mxu0 0.0
    %520 = vmatpush2.msra.mxu0 0.0
    %521 = vmatprep.subr.mxu0 0.0
    %522 = vmatpush2.msra.mxu0 0.0
    %523 = vmatprep.subr.mxu0 0.0
    %524 = vmatpush2.msra.mxu0 0.0
    %525 = vmatprep.subr.mxu0 0.0
    %526 = vmatpush2.msra.mxu0 0.0
    %527 = vmatprep.subr.mxu0 0.0
    %528 = vmatpush2.msra.mxu0 0.0
    %529 = vmatprep.subr.mxu0 0.0
    %530 = vmatpush2.msra.mxu0 0.0
    %531 = vmatprep.subr.mxu0 0.0
    %532 = vmatpush2.msra.mxu0 0.0
    %533 = vmatprep.subr.mxu0 0.0
    %534 = vmatpush2.msra.mxu0 0.0
    %535 = vmatprep.subr.mxu0 0.0
    %536 = vmatpush2.msra.mxu0 0.0
    %537 = vmatprep.subr.mxu0 0.0
    %538 = vmatpush2.msra.mxu0 0.0
    %539 = vmatprep.subr.mxu0 0.0
    %540 = vmatpush2.msra.mxu0 0.0
    %541 = vmatprep.subr.mxu0 0.0
    %542 = vmatpush2.msra.mxu0 0.0
    %543 = vmatprep.subr.mxu0 0.0
    %544 = vmatpush2.msra.mxu0 0.0
    %545 = vmatprep.subr.mxu0 0.0
    %546 = vmatpush2.msra.mxu0 0.0
    %547 = vmatprep.subr.mxu0 0.0
    %548 = vmatpush2.msra.mxu0 0.0
    %549 = vmatprep.mubr.f32.mxu0 0.0
    %550 = vmatmul.mubr.f32.gmra.mxu0 %v413
    %v551 = vpop.f32.mrf.mxu0
    %v552 = vadd.f32 0.0, %v551
    %v553 = vpop.f32.mrf.mxu0
    %554 = vdwg.mxu0
    %v555 = vadd.f32 %v147, %v552
    %v556 = vtanh.pop %v555
    %557 = vmatprep.subr.mxu0 0.0
    %558 = vmatpush1.msra.mxu0 %v92
    %559 = vmatprep.subr.mxu0 0.0
    %560 = vmatpush1.msra.mxu0 %v91
    %561 = vmatprep.subr.mxu0 0.0
    %562 = vmatpush1.msra.mxu0 %v90
    %563 = vmatprep.subr.mxu0 0.0
    %564 = vmatpush1.msra.mxu0 %v89
    %565 = vmatprep.subr.mxu0 0.0
    %566 = vmatpush1.msra.mxu0 %v88
    %567 = vmatprep.subr.mxu0 0.0
    %568 = vmatpush1.msra.mxu0 %v87
    %569 = vmatprep.subr.mxu0 0.0
    %570 = vmatpush1.msra.mxu0 %v86
    %571 = vmatprep.subr.mxu0 0.0
    %572 = vmatpush1.msra.mxu0 %v85
    %573 = vmatprep.subr.mxu0 0.0
    %574 = vmatpush1.msra.mxu0 %v84
    %575 = vmatprep.subr.mxu0 0.0
    %576 = vmatpush1.msra.mxu0 %v83
    %577 = vmatprep.subr.mxu0 0.0
    %578 = vmatpush1.msra.mxu0 %v82
    %579 = vmatprep.subr.mxu0 0.0
    %580 = vmatpush1.msra.mxu0 %v81
    %581 = vmatprep.subr.mxu0 0.0
    %582 = vmatpush1.msra.mxu0 %v80
    %583 = vmatprep.subr.mxu0 0.0
    %584 = vmatpush1.msra.mxu0 %v79
    %585 = vmatprep.subr.mxu0 0.0
    %586 = vmatpush1.msra.mxu0 %v78
    %587 = vmatprep.subr.mxu0 0.0
    %588 = vmatpush1.msra.mxu0 %v77
    %589 = vmatprep.subr.mxu0 0.0
    %590 = vmatpush2.msra.mxu0 %v108
    %591 = vmatprep.subr.mxu0 0.0
    %592 = vmatpush2.msra.mxu0 %v107
    %593 = vmatprep.subr.mxu0 0.0
    %594 = vmatpush2.msra.mxu0 %v106
    %595 = vmatprep.subr.mxu0 0.0
    %596 = vmatpush2.msra.mxu0 %v105
    %597 = vmatprep.subr.mxu0 0.0
    %598 = vmatpush2.msra.mxu0 %v104
    %599 = vmatprep.subr.mxu0 0.0
    %600 = vmatpush2.msra.mxu0 %v103
    %601 = vmatprep.subr.mxu0 0.0
    %602 = vmatpush2.msra.mxu0 %v102
    %603 = vmatprep.subr.mxu0 0.0
    %604 = vmatpush2.msra.mxu0 %v101
    %605 = vmatprep.subr.mxu0 0.0
    %606 = vmatpush2.msra.mxu0 %v100
    %607 = vmatprep.subr.mxu0 0.0
    %608 = vmatpush2.msra.mxu0 %v99
    %609 = vmatprep.subr.mxu0 0.0
    %610 = vmatpush2.msra.mxu0 %v98
    %611 = vmatprep.subr.mxu0 0.0
    %612 = vmatpush2.msra.mxu0 %v97
    %613 = vmatprep.subr.mxu0 0.0
    %614 = vmatpush2.msra.mxu0 %v96
    %615 = vmatprep.subr.mxu0 0.0
    %616 = vmatpush2.msra.mxu0 %v95
    %617 = vmatprep.subr.mxu0 0.0
    %618 = vmatpush2.msra.mxu0 %v94
    %619 = vmatprep.subr.mxu0 0.0
    %620 = vmatpush2.msra.mxu0 %v93
    %621 = vmatprep.mubr.f32.mxu0 %v484
    %622 = vmatmul.mubr.f32.gmra.mxu0 %v556
    %v623 = vpop.f32.mrf.mxu0
    %v624 = vadd.f32 %v269, %v623
    %v625 = vpop.f32.mrf.mxu0
    %626 = vdwg.mxu0
    %v627 = vtanh.pop %v624
    %628 = vmatprep.subr.mxu0 0.0
    %629 = vmatpush1.msra.mxu0 %v75
    %630 = vmatprep.subr.mxu0 0.0
    %631 = vmatpush1.msra.mxu0 %v74
    %632 = vmatprep.subr.mxu0 0.0
    %633 = vmatpush1.msra.mxu0 %v73
    %634 = vmatprep.subr.mxu0 0.0
    %635 = vmatpush1.msra.mxu0 %v72
    %636 = vmatprep.subr.mxu0 0.0
    %637 = vmatpush1.msra.mxu0 %v71
    %638 = vmatprep.subr.mxu0 0.0
    %639 = vmatpush1.msra.mxu0 %v70
    %640 = vmatprep.subr.mxu0 0.0
    %641 = vmatpush1.msra.mxu0 %v69
    %642 = vmatprep.subr.mxu0 0.0
    %643 = vmatpush1.msra.mxu0 %v68
    %644 = vmatprep.subr.mxu0 0.0
    %645 = vmatpush1.msra.mxu0 %v67
    %646 = vmatprep.subr.mxu0 0.0
    %647 = vmatpush1.msra.mxu0 %v66
    %648 = vmatprep.subr.mxu0 0.0
    %649 = vmatpush1.msra.mxu0 %v65
    %650 = vmatprep.subr.mxu0 0.0
    %651 = vmatpush1.msra.mxu0 %v64
    %652 = vmatprep.subr.mxu0 0.0
    %653 = vmatpush1.msra.mxu0 %v63
    %654 = vmatprep.subr.mxu0 0.0
    %655 = vmatpush1.msra.mxu0 %v62
    %656 = vmatprep.subr.mxu0 0.0
    %657 = vmatpush1.msra.mxu0 %v61
    %658 = vmatprep.subr.mxu0 0.0
    %659 = vmatpush1.msra.mxu0 %v60
    %660 = vmatprep.subr.mxu0 0.0
    %661 = vmatpush2.msra.mxu0 0.0
    %662 = vmatprep.subr.mxu0 0.0
    %663 = vmatpush2.msra.mxu0 0.0
    %664 = vmatprep.subr.mxu0 0.0
    %665 = vmatpush2.msra.mxu0 0.0
    %666 = vmatprep.subr.mxu0 0.0
    %667 = vmatpush2.msra.mxu0 0.0
    %668 = vmatprep.subr.mxu0 0.0
    %669 = vmatpush2.msra.mxu0 0.0
    %670 = vmatprep.subr.mxu0 0.0
    %671 = vmatpush2.msra.mxu0 0.0
    %672 = vmatprep.subr.mxu0 0.0
    %673 = vmatpush2.msra.mxu0 0.0
    %674 = vmatprep.subr.mxu0 0.0
    %675 = vmatpush2.msra.mxu0 0.0
    %676 = vmatprep.subr.mxu0 0.0
    %677 = vmatpush2.msra.mxu0 0.0
    %678 = vmatprep.subr.mxu0 0.0
    %679 = vmatpush2.msra.mxu0 0.0
    %680 = vmatprep.subr.mxu0 0.0
    %681 = vmatpush2.msra.mxu0 0.0
    %682 = vmatprep.subr.mxu0 0.0
    %683 = vmatpush2.msra.mxu0 0.0
    %684 = vmatprep.subr.mxu0 0.0
    %685 = vmatpush2.msra.mxu0 0.0
    %686 = vmatprep.subr.mxu0 0.0
    %687 = vmatpush2.msra.mxu0 0.0
    %688 = vmatprep.subr.mxu0 0.0
    %689 = vmatpush2.msra.mxu0 0.0
    %690 = vmatprep.subr.mxu0 0.0
    %691 = vmatpush2.msra.mxu0 0.0
    %692 = vmatprep.mubr.f32.mxu0 0.0
    %693 = vmatmul.mubr.f32.gmra.mxu0 %v556
    %v694 = vpop.f32.mrf.mxu0
    %v695 = vadd.f32 0.0, %v694
    %v696 = vpop.f32.mrf.mxu0
    %697 = vdwg.mxu0
    %v698 = vadd.f32 %v156, %v695
    %v699 = vtanh.pop %v698
    %700 = vmatprep.subr.mxu0 0.0
    %701 = vmatpush1.msra.mxu0 %v92
    %702 = vmatprep.subr.mxu0 0.0
    %703 = vmatpush1.msra.mxu0 %v91
    %704 = vmatprep.subr.mxu0 0.0
    %705 = vmatpush1.msra.mxu0 %v90
    %706 = vmatprep.subr.mxu0 0.0
    %707 = vmatpush1.msra.mxu0 %v89
    %708 = vmatprep.subr.mxu0 0.0
    %709 = vmatpush1.msra.mxu0 %v88
    %710 = vmatprep.subr.mxu0 0.0
    %711 = vmatpush1.msra.mxu0 %v87
    %712 = vmatprep.subr.mxu0 0.0
    %713 = vmatpush1.msra.mxu0 %v86
    %714 = vmatprep.subr.mxu0 0.0
    %715 = vmatpush1.msra.mxu0 %v85
    %716 = vmatprep.subr.mxu0 0.0
    %717 = vmatpush1.msra.mxu0 %v84
    %718 = vmatprep.subr.mxu0 0.0
    %719 = vmatpush1.msra.mxu0 %v83
    %720 = vmatprep.subr.mxu0 0.0
    %721 = vmatpush1.msra.mxu0 %v82
    %722 = vmatprep.subr.mxu0 0.0
    %723 = vmatpush1.msra.mxu0 %v81
    %724 = vmatprep.subr.mxu0 0.0
    %725 = vmatpush1.msra.mxu0 %v80
    %726 = vmatprep.subr.mxu0 0.0
    %727 = vmatpush1.msra.mxu0 %v79
    %728 = vmatprep.subr.mxu0 0.0
    %729 = vmatpush1.msra.mxu0 %v78
    %730 = vmatprep.subr.mxu0 0.0
    %731 = vmatpush1.msra.mxu0 %v77
    %732 = vmatprep.subr.mxu0 0.0
    %733 = vmatpush2.msra.mxu0 %v108
    %734 = vmatprep.subr.mxu0 0.0
    %735 = vmatpush2.msra.mxu0 %v107
    %736 = vmatprep.subr.mxu0 0.0
    %737 = vmatpush2.msra.mxu0 %v106
    %738 = vmatprep.subr.mxu0 0.0
    %739 = vmatpush2.msra.mxu0 %v105
    %740 = vmatprep.subr.mxu0 0.0
    %741 = vmatpush2.msra.mxu0 %v104
    %742 = vmatprep.subr.mxu0 0.0
    %743 = vmatpush2.msra.mxu0 %v103
    %744 = vmatprep.subr.mxu0 0.0
    %745 = vmatpush2.msra.mxu0 %v102
    %746 = vmatprep.subr.mxu0 0.0
    %747 = vmatpush2.msra.mxu0 %v101
    %748 = vmatprep.subr.mxu0 0.0
    %749 = vmatpush2.msra.mxu0 %v100
    %750 = vmatprep.subr.mxu0 0.0
    %751 = vmatpush2.msra.mxu0 %v99
    %752 = vmatprep.subr.mxu0 0.0
    %753 = vmatpush2.msra.mxu0 %v98
    %754 = vmatprep.subr.mxu0 0.0
    %755 = vmatpush2.msra.mxu0 %v97
    %756 = vmatprep.subr.mxu0 0.0
    %757 = vmatpush2.msra.mxu0 %v96
    %758 = vmatprep.subr.mxu0 0.0
    %759 = vmatpush2.msra.mxu0 %v95
    %760 = vmatprep.subr.mxu0 0.0
    %761 = vmatpush2.msra.mxu0 %v94
    %762 = vmatprep.subr.mxu0 0.0
    %763 = vmatpush2.msra.mxu0 %v93
    %764 = vmatprep.mubr.f32.mxu0 %v627
    %765 = vmatmul.mubr.f32.gmra.mxu0 %v699
    %v766 = vpop.f32.mrf.mxu0
    %v767 = vadd.f32 %v269, %v766
    %v768 = vpop.f32.mrf.mxu0
    %769 = vdwg.mxu0
    %v770 = vtanh.pop %v767
    %771 = vmatprep.subr.mxu0 0.0
    %772 = vmatpush1.msra.mxu0 %v75
    %773 = vmatprep.subr.mxu0 0.0
    %774 = vmatpush1.msra.mxu0 %v74
    %775 = vmatprep.subr.mxu0 0.0
    %776 = vmatpush1.msra.mxu0 %v73
    %777 = vmatprep.subr.mxu0 0.0
    %778 = vmatpush1.msra.mxu0 %v72
    %779 = vmatprep.subr.mxu0 0.0
    %780 = vmatpush1.msra.mxu0 %v71
    %781 = vmatprep.subr.mxu0 0.0
    %782 = vmatpush1.msra.mxu0 %v70
    %783 = vmatprep.subr.mxu0 0.0
    %784 = vmatpush1.msra.mxu0 %v69
    %785 = vmatprep.subr.mxu0 0.0
    %786 = vmatpush1.msra.mxu0 %v68
    %787 = vmatprep.subr.mxu0 0.0
    %788 = vmatpush1.msra.mxu0 %v67
    %789 = vmatprep.subr.mxu0 0.0
    %790 = vmatpush1.msra.mxu0 %v66
    %791 = vmatprep.subr.mxu0 0.0
    %792 = vmatpush1.msra.mxu0 %v65
    %793 = vmatprep.subr.mxu0 0.0
    %794 = vmatpush1.msra.mxu0 %v64
    %795 = vmatprep.subr.mxu0 0.0
    %796 = vmatpush1.msra.mxu0 %v63
    %797 = vmatprep.subr.mxu0 0.0
    %798 = vmatpush1.msra.mxu0 %v62
    %799 = vmatprep.subr.mxu0 0.0
    %800 = vmatpush1.msra.mxu0 %v61
    %801 = vmatprep.subr.mxu0 0.0
    %802 = vmatpush1.msra.mxu0 %v60
    %803 = vmatprep.subr.mxu0 0.0
    %804 = vmatpush2.msra.mxu0 0.0
    %805 = vmatprep.subr.mxu0 0.0
    %806 = vmatpush2.msra.mxu0 0.0
    %807 = vmatprep.subr.mxu0 0.0
    %808 = vmatpush2.msra.mxu0 0.0
    %809 = vmatprep.subr.mxu0 0.0
    %810 = vmatpush2.msra.mxu0 0.0
    %811 = vmatprep.subr.mxu0 0.0
    %812 = vmatpush2.msra.mxu0 0.0
    %813 = vmatprep.subr.mxu0 0.0
    %814 = vmatpush2.msra.mxu0 0.0
    %815 = vmatprep.subr.mxu0 0.0
    %816 = vmatpush2.msra.mxu0 0.0
    %817 = vmatprep.subr.mxu0 0.0
    %818 = vmatpush2.msra.mxu0 0.0
    %819 = vmatprep.subr.mxu0 0.0
    %820 = vmatpush2.msra.mxu0 0.0
    %821 = vmatprep.subr.mxu0 0.0
    %822 = vmatpush2.msra.mxu0 0.0
    %823 = vmatprep.subr.mxu0 0.0
    %824 = vmatpush2.msra.mxu0 0.0
    %825 = vmatprep.subr.mxu0 0.0
    %826 = vmatpush2.msra.mxu0 0.0
    %827 = vmatprep.subr.mxu0 0.0
    %828 = vmatpush2.msra.mxu0 0.0
    %829 = vmatprep.subr.mxu0 0.0
    %830 = vmatpush2.msra.mxu0 0.0
    %831 = vmatprep.subr.mxu0 0.0
    %832 = vmatpush2.msra.mxu0 0.0
    %833 = vmatprep.subr.mxu0 0.0
    %834 = vmatpush2.msra.mxu0 0.0
    %835 = vmatprep.mubr.f32.mxu0 0.0
    %836 = vmatmul.mubr.f32.gmra.mxu0 %v699
    %v837 = vpop.f32.mrf.mxu0
    %v838 = vadd.f32 0.0, %v837
    %v839 = vpop.f32.mrf.mxu0
    %840 = vdwg.mxu0
    %v841 = vadd.f32 %v165, %v838
    %v842 = vtanh.pop %v841
    %843 = vmatprep.subr.mxu0 0.0
    %844 = vmatpush1.msra.mxu0 %v92
    %845 = vmatprep.subr.mxu0 0.0
    %846 = vmatpush1.msra.mxu0 %v91
    %847 = vmatprep.subr.mxu0 0.0
    %848 = vmatpush1.msra.mxu0 %v90
    %849 = vmatprep.subr.mxu0 0.0
    %850 = vmatpush1.msra.mxu0 %v89
    %851 = vmatprep.subr.mxu0 0.0
    %852 = vmatpush1.msra.mxu0 %v88
    %853 = vmatprep.subr.mxu0 0.0
    %854 = vmatpush1.msra.mxu0 %v87
    %855 = vmatprep.subr.mxu0 0.0
    %856 = vmatpush1.msra.mxu0 %v86
    %857 = vmatprep.subr.mxu0 0.0
    %858 = vmatpush1.msra.mxu0 %v85
    %859 = vmatprep.subr.mxu0 0.0
    %860 = vmatpush1.msra.mxu0 %v84
    %861 = vmatprep.subr.mxu0 0.0
    %862 = vmatpush1.msra.mxu0 %v83
    %863 = vmatprep.subr.mxu0 0.0
    %864 = vmatpush1.msra.mxu0 %v82
    %865 = vmatprep.subr.mxu0 0.0
    %866 = vmatpush1.msra.mxu0 %v81
    %867 = vmatprep.subr.mxu0 0.0
    %868 = vmatpush1.msra.mxu0 %v80
    %869 = vmatprep.subr.mxu0 0.0
    %870 = vmatpush1.msra.mxu0 %v79
    %871 = vmatprep.subr.mxu0 0.0
    %872 = vmatpush1.msra.mxu0 %v78
    %873 = vmatprep.subr.mxu0 0.0
    %874 = vmatpush1.msra.mxu0 %v77
    %875 = vmatprep.subr.mxu0 0.0
    %876 = vmatpush2.msra.mxu0 %v108
    %877 = vmatprep.subr.mxu0 0.0
    %878 = vmatpush2.msra.mxu0 %v107
    %879 = vmatprep.subr.mxu0 0.0
    %880 = vmatpush2.msra.mxu0 %v106
    %881 = vmatprep.subr.mxu0 0.0
    %882 = vmatpush2.msra.mxu0 %v105
    %883 = vmatprep.subr.mxu0 0.0
    %884 = vmatpush2.msra.mxu0 %v104
    %885 = vmatprep.subr.mxu0 0.0
    %886 = vmatpush2.msra.mxu0 %v103
    %887 = vmatprep.subr.mxu0 0.0
    %888 = vmatpush2.msra.mxu0 %v102
    %889 = vmatprep.subr.mxu0 0.0
    %890 = vmatpush2.msra.mxu0 %v101
    %891 = vmatprep.subr.mxu0 0.0
    %892 = vmatpush2.msra.mxu0 %v100
    %893 = vmatprep.subr.mxu0 0.0
    %894 = vmatpush2.msra.mxu0 %v99
    %895 = vmatprep.subr.mxu0 0.0
    %896 = vmatpush2.msra.mxu0 %v98
    %897 = vmatprep.subr.mxu0 0.0
    %898 = vmatpush2.msra.mxu0 %v97
    %899 = vmatprep.subr.mxu0 0.0
    %900 = vmatpush2.msra.mxu0 %v96
    %901 = vmatprep.subr.mxu0 0.0
    %902 = vmatpush2.msra.mxu0 %v95
    %903 = vmatprep.subr.mxu0 0.0
    %904 = vmatpush2.msra.mxu0 %v94
    %905 = vmatprep.subr.mxu0 0.0
    %906 = vmatpush2.msra.mxu0 %v93
    %907 = vmatprep.mubr.f32.mxu0 %v770
    %908 = vmatmul.mubr.f32.gmra.mxu0 %v842
    %v909 = vpop.f32.mrf.mxu0
    %v910 = vadd.f32 %v269, %v909
    %v911 = vpop.f32.mrf.mxu0
    %912 = vdwg.mxu0
    %v913 = vtanh.pop %v910
    %914 = vmatprep.subr.mxu0 0.0
    %915 = vmatpush1.msra.mxu0 %v75
    %916 = vmatprep.subr.mxu0 0.0
    %917 = vmatpush1.msra.mxu0 %v74
    %918 = vmatprep.subr.mxu0 0.0
    %919 = vmatpush1.msra.mxu0 %v73
    %920 = vmatprep.subr.mxu0 0.0
    %921 = vmatpush1.msra.mxu0 %v72
    %922 = vmatprep.subr.mxu0 0.0
    %923 = vmatpush1.msra.mxu0 %v71
    %924 = vmatprep.subr.mxu0 0.0
    %925 = vmatpush1.msra.mxu0 %v70
    %926 = vmatprep.subr.mxu0 0.0
    %927 = vmatpush1.msra.mxu0 %v69
    %928 = vmatprep.subr.mxu0 0.0
    %929 = vmatpush1.msra.mxu0 %v68
    %930 = vmatprep.subr.mxu0 0.0
    %931 = vmatpush1.msra.mxu0 %v67
    %932 = vmatprep.subr.mxu0 0.0
    %933 = vmatpush1.msra.mxu0 %v66
    %934 = vmatprep.subr.mxu0 0.0
    %935 = vmatpush1.msra.mxu0 %v65
    %936 = vmatprep.subr.mxu0 0.0
    %937 = vmatpush1.msra.mxu0 %v64
    %938 = vmatprep.subr.mxu0 0.0
    %939 = vmatpush1.msra.mxu0 %v63
    %940 = vmatprep.subr.mxu0 0.0
    %941 = vmatpush1.msra.mxu0 %v62
    %942 = vmatprep.subr.mxu0 0.0
    %943 = vmatpush1.msra.mxu0 %v61
    %944 = vmatprep.subr.mxu0 0.0
    %945 = vmatpush1.msra.mxu0 %v60
    %946 = vmatprep.subr.mxu0 0.0
    %947 = vmatpush2.msra.mxu0 0.0
    %948 = vmatprep.subr.mxu0 0.0
    %949 = vmatpush2.msra.mxu0 0.0
    %950 = vmatprep.subr.mxu0 0.0
    %951 = vmatpush2.msra.mxu0 0.0
    %952 = vmatprep.subr.mxu0 0.0
    %953 = vmatpush2.msra.mxu0 0.0
    %954 = vmatprep.subr.mxu0 0.0
    %955 = vmatpush2.msra.mxu0 0.0
    %956 = vmatprep.subr.mxu0 0.0
    %957 = vmatpush2.msra.mxu0 0.0
    %958 = vmatprep.subr.mxu0 0.0
    %959 = vmatpush2.msra.mxu0 0.0
    %960 = vmatprep.subr.mxu0 0.0
    %961 = vmatpush2.msra.mxu0 0.0
    %962 = vmatprep.subr.mxu0 0.0
    %963 = vmatpush2.msra.mxu0 0.0
    %964 = vmatprep.subr.mxu0 0.0
    %965 = vmatpush2.msra.mxu0 0.0
    %966 = vmatprep.subr.mxu0 0.0
    %967 = vmatpush2.msra.mxu0 0.0
    %968 = vmatprep.subr.mxu0 0.0
    %969 = vmatpush2.msra.mxu0 0.0
    %970 = vmatprep.subr.mxu0 0.0
    %971 = vmatpush2.msra.mxu0 0.0
    %972 = vmatprep.subr.mxu0 0.0
    %973 = vmatpush2.msra.mxu0 0.0
    %974 = vmatprep.subr.mxu0 0.0
    %975 = vmatpush2.msra.mxu0 0.0
    %976 = vmatprep.subr.mxu0 0.0
    %977 = vmatpush2.msra.mxu0 0.0
    %978 = vmatprep.mubr.f32.mxu0 0.0
    %979 = vmatmul.mubr.f32.gmra.mxu0 %v842
    %v980 = vpop.f32.mrf.mxu0
    %v981 = vadd.f32 0.0, %v980
    %v982 = vpop.f32.mrf.mxu0
    %983 = vdwg.mxu0
    %v984 = vadd.f32 %v174, %v981
    %v985 = vtanh.pop %v984
    %986 = vmatprep.subr.mxu0 0.0
    %987 = vmatpush1.msra.mxu0 %v92
    %988 = vmatprep.subr.mxu0 0.0
    %989 = vmatpush1.msra.mxu0 %v91
    %990 = vmatprep.subr.mxu0 0.0
    %991 = vmatpush1.msra.mxu0 %v90
    %992 = vmatprep.subr.mxu0 0.0
    %993 = vmatpush1.msra.mxu0 %v89
    %994 = vmatprep.subr.mxu0 0.0
    %995 = vmatpush1.msra.mxu0 %v88
    %996 = vmatprep.subr.mxu0 0.0
    %997 = vmatpush1.msra.mxu0 %v87
    %998 = vmatprep.subr.mxu0 0.0
    %999 = vmatpush1.msra.mxu0 %v86
    %1000 = vmatprep.subr.mxu0 0.0
    %1001 = vmatpush1.msra.mxu0 %v85
    %1002 = vmatprep.subr.mxu0 0.0
    %1003 = vmatpush1.msra.mxu0 %v84
    %1004 = vmatprep.subr.mxu0 0.0
    %1005 = vmatpush1.msra.mxu0 %v83
    %1006 = vmatprep.subr.mxu0 0.0
    %1007 = vmatpush1.msra.mxu0 %v82
    %1008 = vmatprep.subr.mxu0 0.0
    %1009 = vmatpush1.msra.mxu0 %v81
    %1010 = vmatprep.subr.mxu0 0.0
    %1011 = vmatpush1.msra.mxu0 %v80
    %1012 = vmatprep.subr.mxu0 0.0
    %1013 = vmatpush1.msra.mxu0 %v79
    %1014 = vmatprep.subr.mxu0 0.0
    %1015 = vmatpush1.msra.mxu0 %v78
    %1016 = vmatprep.subr.mxu0 0.0
    %1017 = vmatpush1.msra.mxu0 %v77
    %1018 = vmatprep.subr.mxu0 0.0
    %1019 = vmatpush2.msra.mxu0 %v108
    %1020 = vmatprep.subr.mxu0 0.0
    %1021 = vmatpush2.msra.mxu0 %v107
    %1022 = vmatprep.subr.mxu0 0.0
    %1023 = vmatpush2.msra.mxu0 %v106
    %1024 = vmatprep.subr.mxu0 0.0
    %1025 = vmatpush2.msra.mxu0 %v105
    %1026 = vmatprep.subr.mxu0 0.0
    %1027 = vmatpush2.msra.mxu0 %v104
    %1028 = vmatprep.subr.mxu0 0.0
    %1029 = vmatpush2.msra.mxu0 %v103
    %1030 = vmatprep.subr.mxu0 0.0
    %1031 = vmatpush2.msra.mxu0 %v102
    %1032 = vmatprep.subr.mxu0 0.0
    %1033 = vmatpush2.msra.mxu0 %v101
    %1034 = vmatprep.subr.mxu0 0.0
    %1035 = vmatpush2.msra.mxu0 %v100
    %1036 = vmatprep.subr.mxu0 0.0
    %1037 = vmatpush2.msra.mxu0 %v99
    %1038 = vmatprep.subr.mxu0 0.0
    %1039 = vmatpush2.msra.mxu0 %v98
    %1040 = vmatprep.subr.mxu0 0.0
    %1041 = vmatpush2.msra.mxu0 %v97
    %1042 = vmatprep.subr.mxu0 0.0
    %1043 = vmatpush2.msra.mxu0 %v96
    %1044 = vmatprep.subr.mxu0 0.0
    %1045 = vmatpush2.msra.mxu0 %v95
    %1046 = vmatprep.subr.mxu0 0.0
    %1047 = vmatpush2.msra.mxu0 %v94
    %1048 = vmatprep.subr.mxu0 0.0
    %1049 = vmatpush2.msra.mxu0 %v93
    %1050 = vmatprep.mubr.f32.mxu0 %v913
    %1051 = vmatmul.mubr.f32.gmra.mxu0 %v985
    %v1052 = vpop.f32.mrf.mxu0
    %v1053 = vadd.f32 %v269, %v1052
    %v1054 = vpop.f32.mrf.mxu0
    %1055 = vdwg.mxu0
    %v1056 = vtanh.pop %v1053
    %1057 = vmatprep.subr.mxu0 0.0
    %1058 = vmatpush1.msra.mxu0 %v75
    %1059 = vmatprep.subr.mxu0 0.0
    %1060 = vmatpush1.msra.mxu0 %v74
    %1061 = vmatprep.subr.mxu0 0.0
    %1062 = vmatpush1.msra.mxu0 %v73
    %1063 = vmatprep.subr.mxu0 0.0
    %1064 = vmatpush1.msra.mxu0 %v72
    %1065 = vmatprep.subr.mxu0 0.0
    %1066 = vmatpush1.msra.mxu0 %v71
    %1067 = vmatprep.subr.mxu0 0.0
    %1068 = vmatpush1.msra.mxu0 %v70
    %1069 = vmatprep.subr.mxu0 0.0
    %1070 = vmatpush1.msra.mxu0 %v69
    %1071 = vmatprep.subr.mxu0 0.0
    %1072 = vmatpush1.msra.mxu0 %v68
    %1073 = vmatprep.subr.mxu0 0.0
    %1074 = vmatpush1.msra.mxu0 %v67
    %1075 = vmatprep.subr.mxu0 0.0
    %1076 = vmatpush1.msra.mxu0 %v66
    %1077 = vmatprep.subr.mxu0 0.0
    %1078 = vmatpush1.msra.mxu0 %v65
    %1079 = vmatprep.subr.mxu0 0.0
    %1080 = vmatpush1.msra.mxu0 %v64
    %1081 = vmatprep.subr.mxu0 0.0
    %1082 = vmatpush1.msra.mxu0 %v63
    %1083 = vmatprep.subr.mxu0 0.0
    %1084 = vmatpush1.msra.mxu0 %v62
    %1085 = vmatprep.subr.mxu0 0.0
    %1086 = vmatpush1.msra.mxu0 %v61
    %1087 = vmatprep.subr.mxu0 0.0
    %1088 = vmatpush1.msra.mxu0 %v60
    %1089 = vmatprep.subr.mxu0 0.0
    %1090 = vmatpush2.msra.mxu0 0.0
    %1091 = vmatprep.subr.mxu0 0.0
    %1092 = vmatpush2.msra.mxu0 0.0
    %1093 = vmatprep.subr.mxu0 0.0
    %1094 = vmatpush2.msra.mxu0 0.0
    %1095 = vmatprep.subr.mxu0 0.0
    %1096 = vmatpush2.msra.mxu0 0.0
    %1097 = vmatprep.subr.mxu0 0.0
    %1098 = vmatpush2.msra.mxu0 0.0
    %1099 = vmatprep.subr.mxu0 0.0
    %1100 = vmatpush2.msra.mxu0 0.0
    %1101 = vmatprep.subr.mxu0 0.0
    %1102 = vmatpush2.msra.mxu0 0.0
    %1103 = vmatprep.subr.mxu0 0.0
    %1104 = vmatpush2.msra.mxu0 0.0
    %1105 = vmatprep.subr.mxu0 0.0
    %1106 = vmatpush2.msra.mxu0 0.0
    %1107 = vmatprep.subr.mxu0 0.0
    %1108 = vmatpush2.msra.mxu0 0.0
    %1109 = vmatprep.subr.mxu0 0.0
    %1110 = vmatpush2.msra.mxu0 0.0
    %1111 = vmatprep.subr.mxu0 0.0
    %1112 = vmatpush2.msra.mxu0 0.0
    %1113 = vmatprep.subr.mxu0 0.0
    %1114 = vmatpush2.msra.mxu0 0.0
    %1115 = vmatprep.subr.mxu0 0.0
    %1116 = vmatpush2.msra.mxu0 0.0
    %1117 = vmatprep.subr.mxu0 0.0
    %1118 = vmatpush2.msra.mxu0 0.0
    %1119 = vmatprep.subr.mxu0 0.0
    %1120 = vmatpush2.msra.mxu0 0.0
    %1121 = vmatprep.mubr.f32.mxu0 0.0
    %1122 = vmatmul.mubr.f32.gmra.mxu0 %v985
    %v1123 = vpop.f32.mrf.mxu0
    %v1124 = vadd.f32 0.0, %v1123
    %v1125 = vpop.f32.mrf.mxu0
    %1126 = vdwg.mxu0
    %v1127 = vadd.f32 %v183, %v1124
    %v1128 = vtanh.pop %v1127
    %1129 = vmatprep.subr.mxu0 0.0
    %1130 = vmatpush1.msra.mxu0 %v92
    %1131 = vmatprep.subr.mxu0 0.0
    %1132 = vmatpush1.msra.mxu0 %v91
    %1133 = vmatprep.subr.mxu0 0.0
    %1134 = vmatpush1.msra.mxu0 %v90
    %1135 = vmatprep.subr.mxu0 0.0
    %1136 = vmatpush1.msra.mxu0 %v89
    %1137 = vmatprep.subr.mxu0 0.0
    %1138 = vmatpush1.msra.mxu0 %v88
    %1139 = vmatprep.subr.mxu0 0.0
    %1140 = vmatpush1.msra.mxu0 %v87
    %1141 = vmatprep.subr.mxu0 0.0
    %1142 = vmatpush1.msra.mxu0 %v86
    %1143 = vmatprep.subr.mxu0 0.0
    %1144 = vmatpush1.msra.mxu0 %v85
    %1145 = vmatprep.subr.mxu0 0.0
    %1146 = vmatpush1.msra.mxu0 %v84
    %1147 = vmatprep.subr.mxu0 0.0
    %1148 = vmatpush1.msra.mxu0 %v83
    %1149 = vmatprep.subr.mxu0 0.0
    %1150 = vmatpush1.msra.mxu0 %v82
    %1151 = vmatprep.subr.mxu0 0.0
    %1152 = vmatpush1.msra.mxu0 %v81
    %1153 = vmatprep.subr.mxu0 0.0
    %1154 = vmatpush1.msra.mxu0 %v80
    %1155 = vmatprep.subr.mxu0 0.0
    %1156 = vmatpush1.msra.mxu0 %v79
    %1157 = vmatprep.subr.mxu0 0.0
    %1158 = vmatpush1.msra.mxu0 %v78
    %1159 = vmatprep.subr.mxu0 0.0
    %1160 = vmatpush1.msra.mxu0 %v77
    %1161 = vmatprep.subr.mxu0 0.0
    %1162 = vmatpush2.msra.mxu0 %v108
    %1163 = vmatprep.subr.mxu0 0.0
    %1164 = vmatpush2.msra.mxu0 %v107
    %1165 = vmatprep.subr.mxu0 0.0
    %1166 = vmatpush2.msra.mxu0 %v106
    %1167 = vmatprep.subr.mxu0 0.0
    %1168 = vmatpush2.msra.mxu0 %v105
    %1169 = vmatprep.subr.mxu0 0.0
    %1170 = vmatpush2.msra.mxu0 %v104
    %1171 = vmatprep.subr.mxu0 0.0
    %1172 = vmatpush2.msra.mxu0 %v103
    %1173 = vmatprep.subr.mxu0 0.0
    %1174 = vmatpush2.msra.mxu0 %v102
    %1175 = vmatprep.subr.mxu0 0.0
    %1176 = vmatpush2.msra.mxu0 %v101
    %1177 = vmatprep.subr.mxu0 0.0
    %1178 = vmatpush2.msra.mxu0 %v100
    %1179 = vmatprep.subr.mxu0 0.0
    %1180 = vmatpush2.msra.mxu0 %v99
    %1181 = vmatprep.subr.mxu0 0.0
    %1182 = vmatpush2.msra.mxu0 %v98
    %1183 = vmatprep.subr.mxu0 0.0
    %1184 = vmatpush2.msra.mxu0 %v97
    %1185 = vmatprep.subr.mxu0 0.0
    %1186 = vmatpush2.msra.mxu0 %v96
    %1187 = vmatprep.subr.mxu0 0.0
    %1188 = vmatpush2.msra.mxu0 %v95
    %1189 = vmatprep.subr.mxu0 0.0
    %1190 = vmatpush2.msra.mxu0 %v94
    %1191 = vmatprep.subr.mxu0 0.0
    %1192 = vmatpush2.msra.mxu0 %v93
    %1193 = vmatprep.mubr.f32.mxu0 %v1056
    %1194 = vmatmul.mubr.f32.gmra.mxu0 %v1128
    %v1195 = vpop.f32.mrf.mxu0
    %v1196 = vadd.f32 %v269, %v1195
    %v1197 = vpop.f32.mrf.mxu0
    %1198 = vdwg.mxu0
    %v1199 = vtanh.pop %v1196
    %1200 = vmatprep.subr.mxu0 0.0
    %1201 = vmatpush1.msra.mxu0 %v75
    %1202 = vmatprep.subr.mxu0 0.0
    %1203 = vmatpush1.msra.mxu0 %v74
    %1204 = vmatprep.subr.mxu0 0.0
    %1205 = vmatpush1.msra.mxu0 %v73
    %1206 = vmatprep.subr.mxu0 0.0
    %1207 = vmatpush1.msra.mxu0 %v72
    %1208 = vmatprep.subr.mxu0 0.0
    %1209 = vmatpush1.msra.mxu0 %v71
    %1210 = vmatprep.subr.mxu0 0.0
    %1211 = vmatpush1.msra.mxu0 %v70
    %1212 = vmatprep.subr.mxu0 0.0
    %1213 = vmatpush1.msra.mxu0 %v69
    %1214 = vmatprep.subr.mxu0 0.0
    %1215 = vmatpush1.msra.mxu0 %v68
    %1216 = vmatprep.subr.mxu0 0.0
    %1217 = vmatpush1.msra.mxu0 %v67
    %1218 = vmatprep.subr.mxu0 0.0
    %1219 = vmatpush1.msra.mxu0 %v66
    %1220 = vmatprep.subr.mxu0 0.0
    %1221 = vmatpush1.msra.mxu0 %v65
    %1222 = vmatprep.subr.mxu0 0.0
    %1223 = vmatpush1.msra.mxu0 %v64
    %1224 = vmatprep.subr.mxu0 0.0
    %1225 = vmatpush1.msra.mxu0 %v63
    %1226 = vmatprep.subr.mxu0 0.0
    %1227 = vmatpush1.msra.mxu0 %v62
    %1228 = vmatprep.subr.mxu0 0.0
    %1229 = vmatpush1.msra.mxu0 %v61
    %1230 = vmatprep.subr.mxu0 0.0
    %1231 = vmatpush1.msra.mxu0 %v60
    %1232 = vmatprep.subr.mxu0 0.0
    %1233 = vmatpush2.msra.mxu0 0.0
    %1234 = vmatprep.subr.mxu0 0.0
    %1235 = vmatpush2.msra.mxu0 0.0
    %1236 = vmatprep.subr.mxu0 0.0
    %1237 = vmatpush2.msra.mxu0 0.0
    %1238 = vmatprep.subr.mxu0 0.0
    %1239 = vmatpush2.msra.mxu0 0.0
    %1240 = vmatprep.subr.mxu0 0.0
    %1241 = vmatpush2.msra.mxu0 0.0
    %1242 = vmatprep.subr.mxu0 0.0
    %1243 = vmatpush2.msra.mxu0 0.0
    %1244 = vmatprep.subr.mxu0 0.0
    %1245 = vmatpush2.msra.mxu0 0.0
    %1246 = vmatprep.subr.mxu0 0.0
    %1247 = vmatpush2.msra.mxu0 0.0
    %1248 = vmatprep.subr.mxu0 0.0
    %1249 = vmatpush2.msra.mxu0 0.0
    %1250 = vmatprep.subr.mxu0 0.0
    %1251 = vmatpush2.msra.mxu0 0.0
    %1252 = vmatprep.subr.mxu0 0.0
    %1253 = vmatpush2.msra.mxu0 0.0
    %1254 = vmatprep.subr.mxu0 0.0
    %1255 = vmatpush2.msra.mxu0 0.0
    %1256 = vmatprep.subr.mxu0 0.0
    %1257 = vmatpush2.msra.mxu0 0.0
    %1258 = vmatprep.subr.mxu0 0.0
    %1259 = vmatpush2.msra.mxu0 0.0
    %1260 = vmatprep.subr.mxu0 0.0
    %1261 = vmatpush2.msra.mxu0 0.0
    %1262 = vmatprep.subr.mxu0 0.0
    %1263 = vmatpush2.msra.mxu0 0.0
    %1264 = vmatprep.mubr.f32.mxu0 0.0
    %1265 = vmatmul.mubr.f32.gmra.mxu0 %v1128
    %v1266 = vpop.f32.mrf.mxu0
    %v1267 = vadd.f32 0.0, %v1266
    %v1268 = vpop.f32.mrf.mxu0
    %1269 = vdwg.mxu0
    %v1270 = vadd.f32 %v192, %v1267
    %v1271 = vtanh.pop %v1270
    %1272 = vmatprep.subr.mxu0 0.0
    %1273 = vmatpush1.msra.mxu0 %v92
    %1274 = vmatprep.subr.mxu0 0.0
    %1275 = vmatpush1.msra.mxu0 %v91
    %1276 = vmatprep.subr.mxu0 0.0
    %1277 = vmatpush1.msra.mxu0 %v90
    %1278 = vmatprep.subr.mxu0 0.0
    %1279 = vmatpush1.msra.mxu0 %v89
    %1280 = vmatprep.subr.mxu0 0.0
    %1281 = vmatpush1.msra.mxu0 %v88
    %1282 = vmatprep.subr.mxu0 0.0
    %1283 = vmatpush1.msra.mxu0 %v87
    %1284 = vmatprep.subr.mxu0 0.0
    %1285 = vmatpush1.msra.mxu0 %v86
    %1286 = vmatprep.subr.mxu0 0.0
    %1287 = vmatpush1.msra.mxu0 %v85
    %1288 = vmatprep.subr.mxu0 0.0
    %1289 = vmatpush1.msra.mxu0 %v84
    %1290 = vmatprep.subr.mxu0 0.0
    %1291 = vmatpush1.msra.mxu0 %v83
    %1292 = vmatprep.subr.mxu0 0.0
    %1293 = vmatpush1.msra.mxu0 %v82
    %1294 = vmatprep.subr.mxu0 0.0
    %1295 = vmatpush1.msra.mxu0 %v81
    %1296 = vmatprep.subr.mxu0 0.0
    %1297 = vmatpush1.msra.mxu0 %v80
    %1298 = vmatprep.subr.mxu0 0.0
    %1299 = vmatpush1.msra.mxu0 %v79
    %1300 = vmatprep.subr.mxu0 0.0
    %1301 = vmatpush1.msra.mxu0 %v78
    %1302 = vmatprep.subr.mxu0 0.0
    %1303 = vmatpush1.msra.mxu0 %v77
    %1304 = vmatprep.subr.mxu0 0.0
    %1305 = vmatpush2.msra.mxu0 %v108
    %1306 = vmatprep.subr.mxu0 0.0
    %1307 = vmatpush2.msra.mxu0 %v107
    %1308 = vmatprep.subr.mxu0 0.0
    %1309 = vmatpush2.msra.mxu0 %v106
    %1310 = vmatprep.subr.mxu0 0.0
    %1311 = vmatpush2.msra.mxu0 %v105
    %1312 = vmatprep.subr.mxu0 0.0
    %1313 = vmatpush2.msra.mxu0 %v104
    %1314 = vmatprep.subr.mxu0 0.0
    %1315 = vmatpush2.msra.mxu0 %v103
    %1316 = vmatprep.subr.mxu0 0.0
    %1317 = vmatpush2.msra.mxu0 %v102
    %1318 = vmatprep.subr.mxu0 0.0
    %1319 = vmatpush2.msra.mxu0 %v101
    %1320 = vmatprep.subr.mxu0 0.0
    %1321 = vmatpush2.msra.mxu0 %v100
    %1322 = vmatprep.subr.mxu0 0.0
    %1323 = vmatpush2.msra.mxu0 %v99
    %1324 = vmatprep.subr.mxu0 0.0
    %1325 = vmatpush2.msra.mxu0 %v98
    %1326 = vmatprep.subr.mxu0 0.0
    %1327 = vmatpush2.msra.mxu0 %v97
    %1328 = vmatprep.subr.mxu0 0.0
    %1329 = vmatpush2.msra.mxu0 %v96
    %1330 = vmatprep.subr.mxu0 0.0
    %1331 = vmatpush2.msra.mxu0 %v95
    %1332 = vmatprep.subr.mxu0 0.0
    %1333 = vmatpush2.msra.mxu0 %v94
    %1334 = vmatprep.subr.mxu0 0.0
    %1335 = vmatpush2.msra.mxu0 %v93
    %1336 = vmatprep.mubr.f32.mxu0 %v1199
    %1337 = vmatmul.mubr.f32.gmra.mxu0 %v1271
    %v1338 = vpop.f32.mrf.mxu0
    %v1339 = vadd.f32 %v269, %v1338
    %v1340 = vpop.f32.mrf.mxu0
    %1341 = vdwg.mxu0
    %v1342 = vtanh.pop %v1339
    %v1343 = vld [vmem:[%s6] sm:$0x1]
    %v1345 = vlaneseq
    %v1346 = vshrl.u32 %v1345, 7
    %v1347 = vsub.s32 0, %v1346
    %v1348 = vrot.slane %v1343, %v1347
    %v1350 = vmul.f32 %v1342, %v1348
    %vm1351 = vcmask 1041408
    %v1352 = vsel %vm1351, %v1350, 0.0
    %1353 = vadd.xlane.f32.xlu0 %v1352
    %v1354 = vpop.xlane.xlu0 %1353
    %v1355 = vld [vmem:[#allocation2] sm:$0x1]
    %v1357 = vlaneseq
    %v1358 = vshrl.u32 %v1357, 7
    %v1359 = vsub.s32 0, %v1358
    %v1360 = vrot.slane %v1355, %v1359
    %v1362 = vadd.f32 %v1354, %v1360
    %vm1363 = vcmask 1024
    %1364 = vst.msk [vmem:[%s8] sm:$0x3] %vm1363, %v1362
    // Predicated region
    $region42: #{tpu_custom_call.1} parent=1 // pred_check
      _
    $region43: #{tpu_custom_call.1} parent=1 // pred_check_branch
      %1366 = sbr.rel (0) target = $region45
    $region44: #{tpu_custom_call.1} parent=1 // pred_region
      _
    $region45: #{tpu_custom_call.1} parent=1 // pred_fallthru
      _
    // Predicated region
    $region46: #{tpu_custom_call.1} parent=1 // pred_check
      _
    $region47: #{tpu_custom_call.1} parent=1 // pred_check_branch
      %1368 = sbr.rel (0) target = $region49
    $region48: #{tpu_custom_call.1} parent=1 // pred_region
      _
    $region49: #{tpu_custom_call.1} parent=1 // pred_fallthru
      _
    %1369 = vsyncpa [#allocation4], 1
    %1370 = vsyncpa [#allocation6], 1

</llo_original>
